<compile_context>
chip_gen: v6e
topology: v6e:2x2x1
jax: 0.10.0
libtpu: 0.0.40
codegen_flags: <defaults>
</compile_context>

<pallas_src>
import functools

import jax
import jax.numpy as jnp
from jax import lax
from jax.experimental import pallas as pl
from jax.experimental.pallas import tpu as pltpu


def _linear_attention_kernel(q_ref, k_ref, v_ref, m_ref,
                             wq_ref, bq_ref, wk_ref, bk_ref,
                             wv_ref, bv_ref, wo_ref, bo_ref, hmask_ref,
                             o_ref, *, matmul_dtype):
    def mm(a, b):
        return jnp.dot(a.astype(matmul_dtype), b.astype(matmul_dtype),
                       preferred_element_type=jnp.float32)

    q = q_ref[0]          # (TL, C_in)
    k = k_ref[0]          # (S,  C_in)
    v = v_ref[0]          # (S,  C_in)
    m = m_ref[0]          # (TL, 1)

    # QKV projections (MXU matmuls) + bias.
    Q = mm(q, wq_ref[...]) + bq_ref[...]        # (TL, F)
    K = mm(k, wk_ref[...]) + bk_ref[...]        # (S,  F)
    V = mm(v, wv_ref[...]) + bv_ref[...]        # (S,  F)

    # NOTE: the PyTorch module names its feature map `elu` but implements sigmoid.
    Qs = jax.nn.sigmoid(Q)
    Ks = jax.nn.sigmoid(K)

    hmask = hmask_ref[...]                      # (F, F) block-diagonal 0/1 head mask

    # KV_full = einsum('sd,se->de', Ks, V): contract over S directly (no explicit
    # transpose), then keep only within-head (d, e) blocks.
    KV = lax.dot_general(Ks.astype(matmul_dtype), V.astype(matmul_dtype),
                         dimension_numbers=(((0,), (0,)), ((), ())),
                         preferred_element_type=jnp.float32) * hmask       # (F, F)

    # Per-head denominator, broadcast back to full F width via the same head mask:
    #   denom[:, e] = sum_{d in head(e)} Qs[:, d] * (Ks.sum(s)[d] + 1e-6)
    ksum = jnp.sum(Ks, axis=0, keepdims=True) + 1e-6                       # (1, F)
    denom = mm(Qs * ksum, hmask)                                           # (TL, F)
    Z = pl.reciprocal(denom, approx=False)   # approx=True if tolerance allows

    # out_h = (Q_h @ KV_h) * Z_h for all heads in a single (TL,F)x(F,F) matmul.
    x = mm(Qs, KV) * Z                                                     # (TL, F)

    # Output projection (lane-dense padded width) + sequence-mask multiply.
    out = mm(x, wo_ref[...]) + bo_ref[...]                                 # (TL, C_out_pad)

    # TODO(synk): dropout omitted (inference / eval semantics -> identity).
    o_ref[0] = (out * m).astype(o_ref.dtype)


def linear_attention(queries, keys, values, mask, params, *, n_heads,
                     l_block=None, use_bf16_matmul=False):
    """queries (B,L,Cin), keys/values (B,S,Cin), mask (B,1,L) -> (B,L,Cout)."""
    B, L, c_in = queries.shape
    _, S, _ = keys.shape
    wq, bq, wk, bk, wv, bv, wo, bo = params
    n_features = wq.shape[1]
    c_out = wo.shape[1]
    head_dim = n_features // n_heads

    # L tiling keeps per-step VMEM bounded for long sequences; a single tile when L is small.
    if l_block is None:
        if L <= 512:
            l_block = L
        else:
            l_block = next((c for c in (512, 256, 128, 64, 32, 16, 8) if L % c == 0), L)
    assert L % l_block == 0

    # Lane-dense output: pad C_out up to a multiple of 128 (unmasked vector stores);
    # padding columns have zero weights/bias and are sliced off afterwards.
    c_out_pad = max(128, ((c_out + 127) // 128) * 128)
    wo_p = jnp.zeros((n_features, c_out_pad), wo.dtype).at[:, :c_out].set(wo)
    bo_p = jnp.zeros((c_out_pad,), bo.dtype).at[:c_out].set(bo)

    # Block-diagonal head mask: 1 where row/col features belong to the same head.
    hid = jnp.arange(n_features) // head_dim
    hmask = (hid[:, None] == hid[None, :]).astype(jnp.float32)             # (F, F)

    mask2 = mask[:, 0, :, None].astype(queries.dtype)                      # (B, L, 1)
    bq2, bk2, bv2 = bq[None, :], bk[None, :], bv[None, :]                  # (1, F)
    bo2 = bo_p[None, :]                                                    # (1, C_out_pad)

    matmul_dtype = jnp.bfloat16 if use_bf16_matmul else jnp.float32
    kernel = functools.partial(_linear_attention_kernel, matmul_dtype=matmul_dtype)

    q_spec = pl.BlockSpec((1, l_block, c_in), lambda b, l: (b, l, 0))
    kv_spec = pl.BlockSpec((1, S, c_in), lambda b, l: (b, 0, 0))   # ignore L-tile index
    m_spec = pl.BlockSpec((1, l_block, 1), lambda b, l: (b, l, 0))
    full2d = lambda shape: pl.BlockSpec(shape, lambda b, l: (0, 0))

    out_pad = pl.pallas_call(
        kernel,
        out_shape=jax.ShapeDtypeStruct((B, L, c_out_pad), queries.dtype),
        grid_spec=pltpu.PrefetchScalarGridSpec(
            num_scalar_prefetch=0,
            grid=(B, L // l_block),
            in_specs=[
                q_spec,                 # queries
                kv_spec,                # keys
                kv_spec,                # values
                m_spec,                 # mask
                full2d((c_in, n_features)), full2d((1, n_features)),       # Wq, bq
                full2d((c_in, n_features)), full2d((1, n_features)),       # Wk, bk
                full2d((c_in, n_features)), full2d((1, n_features)),       # Wv, bv
                full2d((n_features, c_out_pad)), full2d((1, c_out_pad)),   # Wo, bo (padded)
                full2d((n_features, n_features)),                          # head mask
            ],
            out_specs=pl.BlockSpec((1, l_block, c_out_pad), lambda b, l: (b, l, 0)),
        ),
        compiler_params=pltpu.CompilerParams(
            dimension_semantics=("parallel", "parallel")),
    )(queries, keys, values, mask2, wq, bq2, wk, bk2, wv, bv2, wo_p, bo2, hmask)

    return out_pad[:, :, :c_out]


def _reference(queries, keys, values, mask, params, *, n_heads):
    """Plain-JAX reference mirroring the PyTorch forward."""
    wq, bq, wk, bk, wv, bv, wo, bo = params
    B, L, _ = queries.shape
    _, S, _ = keys.shape
    F = wq.shape[1]
    d = F // n_heads
    q = (queries @ wq + bq).reshape(B, L, n_heads, d).transpose(0, 2, 1, 3)
    k = (keys @ wk + bk).reshape(B, S, n_heads, d).transpose(0, 2, 1, 3)
    v = (values @ wv + bv).reshape(B, S, n_heads, d).transpose(0, 2, 1, 3)
    q = jax.nn.sigmoid(q)
    k = jax.nn.sigmoid(k)
    KV = jnp.einsum('bhsd,bhse->bhde', k, v)
    Z = 1.0 / jnp.einsum('bhld,bhd->bhl', q, k.sum(axis=-2) + 1e-6)
    x = jnp.einsum('bhde,bhld,bhl->bhle', KV, q, Z).transpose(0, 2, 1, 3).reshape(B, L, F)
    x = x @ wo + bo
    return x * mask[:, 0, :, None]


if __name__ == "__main__":
    B, L, S = 2, 16, 16
    in_channel, n_features, out_channel, n_heads = 8, 32, 8, 4

    key = jax.random.PRNGKey(0)
    ks = jax.random.split(key, 12)
    queries = jax.random.normal(ks[0], (B, L, in_channel), jnp.float32)
    keys_in = jax.random.normal(ks[1], (B, S, in_channel), jnp.float32)
    values = jax.random.normal(ks[2], (B, S, in_channel), jnp.float32)
    mask = (jax.random.uniform(ks[3], (B, 1, L)) > 0.3).astype(jnp.float32)

    def lin_init(kw, kb, fan_in, fan_out):
        bound = 1.0 / jnp.sqrt(fan_in)
        w = jax.random.uniform(kw, (fan_in, fan_out), jnp.float32, -bound, bound)
        b = jax.random.uniform(kb, (fan_out,), jnp.float32, -bound, bound)
        return w, b

    wq, bq = lin_init(ks[4], ks[5], in_channel, n_features)
    wk, bk = lin_init(ks[6], ks[7], in_channel, n_features)
    wv, bv = lin_init(ks[8], ks[9], in_channel, n_features)
    wo, bo = lin_init(ks[10], ks[11], n_features, out_channel)
    params = (wq, bq, wk, bk, wv, bv, wo, bo)

    out = linear_attention(queries, keys_in, values, mask, params, n_heads=n_heads)
    out = jax.block_until_ready(out)

    ref = _reference(queries, keys_in, values, mask, params, n_heads=n_heads)
    assert out.shape == (B, L, out_channel)
    assert jnp.allclose(out, ref, atol=1e-4, rtol=1e-4), "mismatch vs reference"
    print("KERNEL_OK")
</pallas_src>

<mosaic_0001>
module attributes {stable_mosaic.version = 11 : i64} {
  func.func @_linear_attention_kernel(%arg0: i32, %arg1: i32, %arg2: memref<1x16x8xf32, #tpu.memory_space<vmem>>, %arg3: memref<1x16x8xf32, #tpu.memory_space<vmem>>, %arg4: memref<1x16x8xf32, #tpu.memory_space<vmem>>, %arg5: memref<1x16x1xf32, #tpu.memory_space<vmem>>, %arg6: memref<8x32xf32, #tpu.memory_space<vmem>>, %arg7: memref<1x32xf32, #tpu.memory_space<vmem>>, %arg8: memref<8x32xf32, #tpu.memory_space<vmem>>, %arg9: memref<1x32xf32, #tpu.memory_space<vmem>>, %arg10: memref<8x32xf32, #tpu.memory_space<vmem>>, %arg11: memref<1x32xf32, #tpu.memory_space<vmem>>, %arg12: memref<32x128xf32, #tpu.memory_space<vmem>>, %arg13: memref<1x128xf32, #tpu.memory_space<vmem>>, %arg14: memref<32x32xf32, #tpu.memory_space<vmem>>, %arg15: memref<1x16x128xf32, #tpu.memory_space<vmem>>) attributes {dimension_semantics = [#tpu.dimension_semantics<parallel>, #tpu.dimension_semantics<parallel>], iteration_bounds = array<i64: 2, 1>, scalar_prefetch = 0 : i64, scratch_operands = 0 : i64, tpu.core_type = #tpu.core_type<tc>, window_params = [{transform_indices = @transform_0, window_bounds = array<i64: 1, 16, 8>}, {transform_indices = @transform_1, window_bounds = array<i64: 1, 16, 8>}, {transform_indices = @transform_2, window_bounds = array<i64: 1, 16, 8>}, {transform_indices = @transform_3, window_bounds = array<i64: 1, 16, 1>}, {pipeline_mode = #tpu.pipeline_mode<synchronous>, transform_indices = @transform_4, window_bounds = array<i64: 8, 32>}, {pipeline_mode = #tpu.pipeline_mode<synchronous>, transform_indices = @transform_5, window_bounds = array<i64: 1, 32>}, {pipeline_mode = #tpu.pipeline_mode<synchronous>, transform_indices = @transform_6, window_bounds = array<i64: 8, 32>}, {pipeline_mode = #tpu.pipeline_mode<synchronous>, transform_indices = @transform_7, window_bounds = array<i64: 1, 32>}, {pipeline_mode = #tpu.pipeline_mode<synchronous>, transform_indices = @transform_8, window_bounds = array<i64: 8, 32>}, {pipeline_mode = #tpu.pipeline_mode<synchronous>, transform_indices = @transform_9, window_bounds = array<i64: 1, 32>}, {pipeline_mode = #tpu.pipeline_mode<synchronous>, transform_indices = @transform_10, window_bounds = array<i64: 32, 128>}, {pipeline_mode = #tpu.pipeline_mode<synchronous>, transform_indices = @transform_11, window_bounds = array<i64: 1, 128>}, {pipeline_mode = #tpu.pipeline_mode<synchronous>, transform_indices = @transform_12, window_bounds = array<i64: 32, 32>}, {transform_indices = @transform_13, window_bounds = array<i64: 1, 16, 128>}]} {
    %c0 = arith.constant 0 : index
    %c0_0 = arith.constant 0 : index
    %c0_1 = arith.constant 0 : index
    %0 = vector.load %arg2[%c0, %c0_0, %c0_1] : memref<1x16x8xf32, #tpu.memory_space<vmem>>, vector<1x16x8xf32>
    %1 = vector.shape_cast %0 : vector<1x16x8xf32> to vector<16x8xf32>
    %c0_2 = arith.constant 0 : index
    %c0_3 = arith.constant 0 : index
    %c0_4 = arith.constant 0 : index
    %2 = vector.load %arg3[%c0_2, %c0_3, %c0_4] : memref<1x16x8xf32, #tpu.memory_space<vmem>>, vector<1x16x8xf32>
    %3 = vector.shape_cast %2 : vector<1x16x8xf32> to vector<16x8xf32>
    %c0_5 = arith.constant 0 : index
    %c0_6 = arith.constant 0 : index
    %c0_7 = arith.constant 0 : index
    %4 = vector.load %arg4[%c0_5, %c0_6, %c0_7] : memref<1x16x8xf32, #tpu.memory_space<vmem>>, vector<1x16x8xf32>
    %5 = vector.shape_cast %4 : vector<1x16x8xf32> to vector<16x8xf32>
    %c0_8 = arith.constant 0 : index
    %c0_9 = arith.constant 0 : index
    %c0_10 = arith.constant 0 : index
    %6 = vector.load %arg5[%c0_8, %c0_9, %c0_10] : memref<1x16x1xf32, #tpu.memory_space<vmem>>, vector<1x16x1xf32>
    %7 = vector.shape_cast %6 : vector<1x16x1xf32> to vector<16x1xf32>
    %c0_11 = arith.constant 0 : index
    %c0_12 = arith.constant 0 : index
    %8 = vector.load %arg6[%c0_11, %c0_12] : memref<8x32xf32, #tpu.memory_space<vmem>>, vector<8x32xf32>
    %cst = arith.constant dense<0.000000e+00> : vector<16x32xf32>
    %9 = tpu.matmul %1, %8, %cst {dimension_numbers = #tpu.dot_dimension_numbers<[1], [0], [0], [1], [0, 0, 1, 1], [], []>} : vector<16x8xf32>, vector<8x32xf32>, vector<16x32xf32> -> vector<16x32xf32>
    %c0_13 = arith.constant 0 : index
    %c0_14 = arith.constant 0 : index
    %10 = vector.load %arg7[%c0_13, %c0_14] : memref<1x32xf32, #tpu.memory_space<vmem>>, vector<1x32xf32>
    %11 = vector.broadcast %10 : vector<1x32xf32> to vector<16x32xf32>
    %12 = arith.addf %9, %11 : vector<16x32xf32>
    %c0_15 = arith.constant 0 : index
    %c0_16 = arith.constant 0 : index
    %13 = vector.load %arg8[%c0_15, %c0_16] : memref<8x32xf32, #tpu.memory_space<vmem>>, vector<8x32xf32>
    %cst_17 = arith.constant dense<0.000000e+00> : vector<16x32xf32>
    %14 = tpu.matmul %3, %13, %cst_17 {dimension_numbers = #tpu.dot_dimension_numbers<[1], [0], [0], [1], [0, 0, 1, 1], [], []>} : vector<16x8xf32>, vector<8x32xf32>, vector<16x32xf32> -> vector<16x32xf32>
    %c0_18 = arith.constant 0 : index
    %c0_19 = arith.constant 0 : index
    %15 = vector.load %arg9[%c0_18, %c0_19] : memref<1x32xf32, #tpu.memory_space<vmem>>, vector<1x32xf32>
    %16 = vector.broadcast %15 : vector<1x32xf32> to vector<16x32xf32>
    %17 = arith.addf %14, %16 : vector<16x32xf32>
    %c0_20 = arith.constant 0 : index
    %c0_21 = arith.constant 0 : index
    %18 = vector.load %arg10[%c0_20, %c0_21] : memref<8x32xf32, #tpu.memory_space<vmem>>, vector<8x32xf32>
    %cst_22 = arith.constant dense<0.000000e+00> : vector<16x32xf32>
    %19 = tpu.matmul %5, %18, %cst_22 {dimension_numbers = #tpu.dot_dimension_numbers<[1], [0], [0], [1], [0, 0, 1, 1], [], []>} : vector<16x8xf32>, vector<8x32xf32>, vector<16x32xf32> -> vector<16x32xf32>
    %c0_23 = arith.constant 0 : index
    %c0_24 = arith.constant 0 : index
    %20 = vector.load %arg11[%c0_23, %c0_24] : memref<1x32xf32, #tpu.memory_space<vmem>>, vector<1x32xf32>
    %21 = vector.broadcast %20 : vector<1x32xf32> to vector<16x32xf32>
    %22 = arith.addf %19, %21 : vector<16x32xf32>
    %23 = arith.negf %12 : vector<16x32xf32>
    %24 = math.exp %23 : vector<16x32xf32>
    %cst_25 = arith.constant 1.000000e+00 : f32
    %25 = vector.broadcast %cst_25 : f32 to vector<16x32xf32>
    %26 = arith.addf %25, %24 : vector<16x32xf32>
    %27 = arith.divf %25, %26 : vector<16x32xf32>
    %28 = arith.negf %17 : vector<16x32xf32>
    %29 = math.exp %28 : vector<16x32xf32>
    %cst_26 = arith.constant 1.000000e+00 : f32
    %30 = vector.broadcast %cst_26 : f32 to vector<16x32xf32>
    %31 = arith.addf %30, %29 : vector<16x32xf32>
    %32 = arith.divf %30, %31 : vector<16x32xf32>
    %c0_27 = arith.constant 0 : index
    %c0_28 = arith.constant 0 : index
    %33 = vector.load %arg14[%c0_27, %c0_28] : memref<32x32xf32, #tpu.memory_space<vmem>>, vector<32x32xf32>
    %cst_29 = arith.constant dense<0.000000e+00> : vector<32x32xf32>
    %34 = tpu.matmul %32, %22, %cst_29 {dimension_numbers = #tpu.dot_dimension_numbers<[0], [0], [1], [1], [0, 1, 1, 1], [], []>} : vector<16x32xf32>, vector<16x32xf32>, vector<32x32xf32> -> vector<32x32xf32>
    %35 = arith.mulf %34, %33 : vector<32x32xf32>
    %cst_30 = arith.constant dense<0.000000e+00> : vector<32xf32>
    %36 = vector.multi_reduction <add>, %32, %cst_30 [0] : vector<16x32xf32> to vector<32xf32>
    %37 = vector.shape_cast %36 : vector<32xf32> to vector<1x32xf32>
    %cst_31 = arith.constant 9.99999997E-7 : f32
    %38 = vector.broadcast %cst_31 : f32 to vector<1x32xf32>
    %39 = arith.addf %37, %38 : vector<1x32xf32>
    %40 = vector.broadcast %39 : vector<1x32xf32> to vector<16x32xf32>
    %41 = arith.mulf %27, %40 : vector<16x32xf32>
    %cst_32 = arith.constant dense<0.000000e+00> : vector<16x32xf32>
    %42 = tpu.matmul %41, %33, %cst_32 {dimension_numbers = #tpu.dot_dimension_numbers<[1], [0], [0], [1], [0, 0, 1, 1], [], []>} : vector<16x32xf32>, vector<32x32xf32>, vector<16x32xf32> -> vector<16x32xf32>
    %43 = tpu.reciprocal %42 : vector<16x32xf32> -> vector<16x32xf32>
    %cst_33 = arith.constant dense<0.000000e+00> : vector<16x32xf32>
    %44 = tpu.matmul %27, %35, %cst_33 {dimension_numbers = #tpu.dot_dimension_numbers<[1], [0], [0], [1], [0, 0, 1, 1], [], []>} : vector<16x32xf32>, vector<32x32xf32>, vector<16x32xf32> -> vector<16x32xf32>
    %45 = arith.mulf %44, %43 : vector<16x32xf32>
    %c0_34 = arith.constant 0 : index
    %c0_35 = arith.constant 0 : index
    %46 = vector.load %arg12[%c0_34, %c0_35] : memref<32x128xf32, #tpu.memory_space<vmem>>, vector<32x128xf32>
    %cst_36 = arith.constant dense<0.000000e+00> : vector<16x128xf32>
    %47 = tpu.matmul %45, %46, %cst_36 {dimension_numbers = #tpu.dot_dimension_numbers<[1], [0], [0], [1], [0, 0, 1, 1], [], []>} : vector<16x32xf32>, vector<32x128xf32>, vector<16x128xf32> -> vector<16x128xf32>
    %c0_37 = arith.constant 0 : index
    %c0_38 = arith.constant 0 : index
    %48 = vector.load %arg13[%c0_37, %c0_38] : memref<1x128xf32, #tpu.memory_space<vmem>>, vector<1x128xf32>
    %49 = vector.broadcast %48 : vector<1x128xf32> to vector<16x128xf32>
    %50 = arith.addf %47, %49 : vector<16x128xf32>
    %51 = vector.broadcast %7 : vector<16x1xf32> to vector<16x128xf32>
    %52 = arith.mulf %50, %51 : vector<16x128xf32>
    %c0_39 = arith.constant 0 : index
    %c0_40 = arith.constant 0 : index
    %c0_41 = arith.constant 0 : index
    %53 = vector.load %arg15[%c0_39, %c0_40, %c0_41] : memref<1x16x128xf32, #tpu.memory_space<vmem>>, vector<1x16x128xf32>
    %54 = vector.shape_cast %53 : vector<1x16x128xf32> to vector<16x128xf32>
    %55 = vector.shape_cast %52 : vector<16x128xf32> to vector<1x16x128xf32>
    tpu.vector_store %arg15[%c0_39, %c0_40, %c0_41], %55 {strides = array<i32>} : memref<1x16x128xf32, #tpu.memory_space<vmem>>, vector<1x16x128xf32>,
    return
  }
  func.func @transform_0(%arg0: i32, %arg1: i32) -> (i32, i32, i32) {
    %c0_i32 = arith.constant 0 : i32
    %c0_i32_0 = arith.constant 0 : i32
    return %arg0, %arg1, %c0_i32 : i32, i32, i32
  }
  func.func @transform_1(%arg0: i32, %arg1: i32) -> (i32, i32, i32) {
    %c0_i32 = arith.constant 0 : i32
    %c0_i32_0 = arith.constant 0 : i32
    %c0_i32_1 = arith.constant 0 : i32
    return %arg0, %c0_i32, %c0_i32_0 : i32, i32, i32
  }
  func.func @transform_2(%arg0: i32, %arg1: i32) -> (i32, i32, i32) {
    %c0_i32 = arith.constant 0 : i32
    %c0_i32_0 = arith.constant 0 : i32
    %c0_i32_1 = arith.constant 0 : i32
    return %arg0, %c0_i32, %c0_i32_0 : i32, i32, i32
  }
  func.func @transform_3(%arg0: i32, %arg1: i32) -> (i32, i32, i32) {
    %c0_i32 = arith.constant 0 : i32
    %c0_i32_0 = arith.constant 0 : i32
    return %arg0, %arg1, %c0_i32 : i32, i32, i32
  }
  func.func @transform_4(%arg0: i32, %arg1: i32) -> (i32, i32) {
    %c0_i32 = arith.constant 0 : i32
    %c0_i32_0 = arith.constant 0 : i32
    %c0_i32_1 = arith.constant 0 : i32
    return %c0_i32, %c0_i32_0 : i32, i32
  }
  func.func @transform_5(%arg0: i32, %arg1: i32) -> (i32, i32) {
    %c0_i32 = arith.constant 0 : i32
    %c0_i32_0 = arith.constant 0 : i32
    %c0_i32_1 = arith.constant 0 : i32
    return %c0_i32, %c0_i32_0 : i32, i32
  }
  func.func @transform_6(%arg0: i32, %arg1: i32) -> (i32, i32) {
    %c0_i32 = arith.constant 0 : i32
    %c0_i32_0 = arith.constant 0 : i32
    %c0_i32_1 = arith.constant 0 : i32
    return %c0_i32, %c0_i32_0 : i32, i32
  }
  func.func @transform_7(%arg0: i32, %arg1: i32) -> (i32, i32) {
    %c0_i32 = arith.constant 0 : i32
    %c0_i32_0 = arith.constant 0 : i32
    %c0_i32_1 = arith.constant 0 : i32
    return %c0_i32, %c0_i32_0 : i32, i32
  }
  func.func @transform_8(%arg0: i32, %arg1: i32) -> (i32, i32) {
    %c0_i32 = arith.constant 0 : i32
    %c0_i32_0 = arith.constant 0 : i32
    %c0_i32_1 = arith.constant 0 : i32
    return %c0_i32, %c0_i32_0 : i32, i32
  }
  func.func @transform_9(%arg0: i32, %arg1: i32) -> (i32, i32) {
    %c0_i32 = arith.constant 0 : i32
    %c0_i32_0 = arith.constant 0 : i32
    %c0_i32_1 = arith.constant 0 : i32
    return %c0_i32, %c0_i32_0 : i32, i32
  }
  func.func @transform_10(%arg0: i32, %arg1: i32) -> (i32, i32) {
    %c0_i32 = arith.constant 0 : i32
    %c0_i32_0 = arith.constant 0 : i32
    %c0_i32_1 = arith.constant 0 : i32
    return %c0_i32, %c0_i32_0 : i32, i32
  }
  func.func @transform_11(%arg0: i32, %arg1: i32) -> (i32, i32) {
    %c0_i32 = arith.constant 0 : i32
    %c0_i32_0 = arith.constant 0 : i32
    %c0_i32_1 = arith.constant 0 : i32
    return %c0_i32, %c0_i32_0 : i32, i32
  }
  func.func @transform_12(%arg0: i32, %arg1: i32) -> (i32, i32) {
    %c0_i32 = arith.constant 0 : i32
    %c0_i32_0 = arith.constant 0 : i32
    %c0_i32_1 = arith.constant 0 : i32
    return %c0_i32, %c0_i32_0 : i32, i32
  }
  func.func @transform_13(%arg0: i32, %arg1: i32) -> (i32, i32, i32) {
    %c0_i32 = arith.constant 0 : i32
    %c0_i32_0 = arith.constant 0 : i32
    return %arg0, %arg1, %c0_i32 : i32, i32, i32
  }
}

</mosaic_0001>

<llo_original>
// kernel: tpu_custom_call.1
$region0: #{tpu_custom_call.1}
  #allocation0 [shape = 'u32[]', space=smem, size = 0x4, offset = 0x4, fixed_abs, tag = 'smem constant byte address 0x4 - core index']
  #allocation1 [shape = 'u32[144,128]{1,0:T(1,128)}', space=vmem, size = 0x12000, scoped, tag = 'internal scratch']
  %s0 = inlined_call_operand.vmem [shape: f32[2,16,8], index: 0, kind: input, shape index: {}]
  %s1 = inlined_call_operand.vmem [shape: f32[2,16,8], index: 1, kind: input, shape index: {}]
  %s2 = inlined_call_operand.vmem [shape: f32[2,16,8], index: 2, kind: input, shape index: {}]
  %s3 = inlined_call_operand.vmem [shape: f32[2,16,1], index: 3, kind: input, shape index: {}]
  %s4 = inlined_call_operand.vmem [shape: f32[8,32], index: 4, kind: input, shape index: {}]
  %s5 = inlined_call_operand.vmem [shape: f32[1,32], index: 5, kind: input, shape index: {}]
  %s6 = inlined_call_operand.vmem [shape: f32[8,32], index: 6, kind: input, shape index: {}]
  %s7 = inlined_call_operand.vmem [shape: f32[1,32], index: 7, kind: input, shape index: {}]
  %s8 = inlined_call_operand.vmem [shape: f32[8,32], index: 8, kind: input, shape index: {}]
  %s9 = inlined_call_operand.vmem [shape: f32[1,32], index: 9, kind: input, shape index: {}]
  %s10 = inlined_call_operand.vmem [shape: f32[32,128], index: 10, kind: input, shape index: {}]
  %s11 = inlined_call_operand.vmem [shape: f32[1,128], index: 11, kind: input, shape index: {}]
  %s12 = inlined_call_operand.vmem [shape: f32[32,32], index: 12, kind: input, shape index: {}]
  %s13 = inlined_call_operand.hbm [shape: f32[2,16,128], index: 13, kind: output, shape index: {}]
  %s14 = sld [smem:[#allocation0]]
  $region85: #{tpu_custom_call.1} parent=0
    _
  %s16 = ssub.s32 1, %s14
  %s17 = scalar_select 0, %s16, %s14
  $region1: #{tpu_custom_call.1} parent=0
    #allocation2 [shape = 'u8[16384]{0}', space=vmem, size = 0x4000, scoped, tag = 'output window, operand 0']
    #allocation3 [shape = 's32[2]{0}', space=sflag, size = 0x8, scoped, tag = 'scoped memory for tpu_custom_call.1']
    %18 = vsyncpa [#allocation3], 0
    %s19 = scalar_lea.sflag [#allocation3], 1
    %20 = vsyncpa %s19, 0
    loop: start=0, step=1, limit=4
    $region2: #{tpu_custom_call.1} parent=1 // loop_pre_header
      _
    $region3: #{tpu_custom_call.1} parent=1 // loop_header
      %s22 = sphi 0, %s26
      %p23 = scmp.ge.s32.totalorder %s22, 4
      %s29 = sphi 0, %s41
      %s30 = sphi 0, %s37
      %s31 = sphi 0, %s29
      %s32 = sphi 0, %s30
      %s33 = sphi 0, %s31
      %s34 = sphi 0, %s32
      %s46 = sphi 0, %s48
      %s49 = sphi 0, %s46
      %s50 = sphi 0, %s49
      %s66 = sphi 0, %s50
      %s72 = sphi 0, %s74
      %s75 = sphi 0, %s72
      %s76 = sphi 0, %s75
      %s92 = sphi 0, %s76
      %s98 = sphi 0, %s100
      %s101 = sphi 0, %s98
      %s102 = sphi 0, %s101
      %s118 = sphi 0, %s102
      %s126 = sphi 0, %s128
      %s129 = sphi 0, %s126
      %s130 = sphi 0, %s129
      %s146 = sphi 0, %s130
      %s150 = sphi 0, %s150
      %s152 = sphi 0, %s150
      %s153 = sphi 0, %s152
      %s167 = sphi 0, %s153
      %s171 = sphi 0, %s171
      %s173 = sphi 0, %s171
      %s174 = sphi 0, %s173
      %s188 = sphi 0, %s174
      %s192 = sphi 0, %s192
      %s194 = sphi 0, %s192
      %s195 = sphi 0, %s194
      %s209 = sphi 0, %s195
      %s213 = sphi 0, %s213
      %s215 = sphi 0, %s213
      %s216 = sphi 0, %s215
      %s230 = sphi 0, %s216
      %s234 = sphi 0, %s234
      %s236 = sphi 0, %s234
      %s237 = sphi 0, %s236
      %s251 = sphi 0, %s237
      %s255 = sphi 0, %s255
      %s257 = sphi 0, %s255
      %s258 = sphi 0, %s257
      %s272 = sphi 0, %s258
      %s276 = sphi 0, %s276
      %s278 = sphi 0, %s276
      %s279 = sphi 0, %s278
      %s293 = sphi 0, %s279
      %s297 = sphi 0, %s297
      %s299 = sphi 0, %s297
      %s300 = sphi 0, %s299
      %s314 = sphi 0, %s300
      %s318 = sphi 0, %s318
      %s320 = sphi 0, %s318
      %s321 = sphi 0, %s320
      %s335 = sphi 0, %s321
      %s343 = sphi 0, %s345
      %s346 = sphi 0, %s343
      %s347 = sphi 0, %s346
      %s363 = sphi 0, %s347
    $region4: #{tpu_custom_call.1} parent=1 // loop_header_branch
      %25 = sbr.rel (%p23) target = $region8
    $region5: #{tpu_custom_call.1} parent=1 // loop_body
      %s27 = ssub.s32 %s22, 1
      %s28 = ssub.s32 %s22, 2
      %s35 = sadd.s32 1, %s30
      %p36 = scmp.ge.s32.totalorder %s35, 1
      %s37 = scalar_select %p36, 0, %s35
      %s38 = sadd.s32 1, %s29
      %s39 = scalar_select %p36, %s38, %s29
      %p40 = scmp.ge.s32.totalorder %s39, 2
      %s41 = scalar_select %p40, 0, %s39
      %s42 = ssub.s32 %s29, %s41
      %s43 = ssub.s32 %s30, %s37
      %s44 = sor.u32 %s42, %s43
      %p45 = scmp.eq.s32.totalorder %s44, 0
      %s47 = sadd.s32 %s46, 1
      %s48 = scalar_select %p45, %s46, %s47
      %p51 = pneg %p45
      %p52 = scmp.eq.s32.totalorder %s22, 1
      %p53 = por %p51, %p52
      %p54 = scmp.ne.s32.totalorder %s46, %s49
      %p55 = scmp.eq.s32.totalorder %s22, 0
      %p56 = por %p54, %p55
      %p57 = scmp.ne.s32.totalorder %s46, %s49
      %p58 = scmp.eq.s32.totalorder %s27, 1
      %p59 = por %p57, %p58
      %p60 = scmp.ne.s32.totalorder %s49, %s50
      %p61 = scmp.eq.s32.totalorder %s27, 0
      %p62 = por %p60, %p61
      %p63 = scmp.ne.s32.totalorder %s49, %s50
      %p64 = scmp.eq.s32.totalorder %s28, 1
      %p65 = por %p63, %p64
      %p67 = scmp.ne.s32.totalorder %s50, %s66
      %p68 = scmp.eq.s32.totalorder %s28, 0
      %p69 = por %p67, %p68
      %s70 = ssub.s32 %s29, %s41
      %p71 = scmp.eq.s32.totalorder %s70, 0
      %s73 = sadd.s32 %s72, 1
      %s74 = scalar_select %p71, %s72, %s73
      %p77 = pneg %p71
      %p78 = scmp.eq.s32.totalorder %s22, 1
      %p79 = por %p77, %p78
      %p80 = scmp.ne.s32.totalorder %s72, %s75
      %p81 = scmp.eq.s32.totalorder %s22, 0
      %p82 = por %p80, %p81
      %p83 = scmp.ne.s32.totalorder %s72, %s75
      %p84 = scmp.eq.s32.totalorder %s27, 1
      %p85 = por %p83, %p84
      %p86 = scmp.ne.s32.totalorder %s75, %s76
      %p87 = scmp.eq.s32.totalorder %s27, 0
      %p88 = por %p86, %p87
      %p89 = scmp.ne.s32.totalorder %s75, %s76
      %p90 = scmp.eq.s32.totalorder %s28, 1
      %p91 = por %p89, %p90
      %p93 = scmp.ne.s32.totalorder %s76, %s92
      %p94 = scmp.eq.s32.totalorder %s28, 0
      %p95 = por %p93, %p94
      %s96 = ssub.s32 %s29, %s41
      %p97 = scmp.eq.s32.totalorder %s96, 0
      %s99 = sadd.s32 %s98, 1
      %s100 = scalar_select %p97, %s98, %s99
      %p103 = pneg %p97
      %p104 = scmp.eq.s32.totalorder %s22, 1
      %p105 = por %p103, %p104
      %p106 = scmp.ne.s32.totalorder %s98, %s101
      %p107 = scmp.eq.s32.totalorder %s22, 0
      %p108 = por %p106, %p107
      %p109 = scmp.ne.s32.totalorder %s98, %s101
      %p110 = scmp.eq.s32.totalorder %s27, 1
      %p111 = por %p109, %p110
      %p112 = scmp.ne.s32.totalorder %s101, %s102
      %p113 = scmp.eq.s32.totalorder %s27, 0
      %p114 = por %p112, %p113
      %p115 = scmp.ne.s32.totalorder %s101, %s102
      %p116 = scmp.eq.s32.totalorder %s28, 1
      %p117 = por %p115, %p116
      %p119 = scmp.ne.s32.totalorder %s102, %s118
      %p120 = scmp.eq.s32.totalorder %s28, 0
      %p121 = por %p119, %p120
      %s122 = ssub.s32 %s29, %s41
      %s123 = ssub.s32 %s30, %s37
      %s124 = sor.u32 %s122, %s123
      %p125 = scmp.eq.s32.totalorder %s124, 0
      %s127 = sadd.s32 %s126, 1
      %s128 = scalar_select %p125, %s126, %s127
      %p131 = pneg %p125
      %p132 = scmp.eq.s32.totalorder %s22, 1
      %p133 = por %p131, %p132
      %p134 = scmp.ne.s32.totalorder %s126, %s129
      %p135 = scmp.eq.s32.totalorder %s22, 0
      %p136 = por %p134, %p135
      %p137 = scmp.ne.s32.totalorder %s126, %s129
      %p138 = scmp.eq.s32.totalorder %s27, 1
      %p139 = por %p137, %p138
      %p140 = scmp.ne.s32.totalorder %s129, %s130
      %p141 = scmp.eq.s32.totalorder %s27, 0
      %p142 = por %p140, %p141
      %p143 = scmp.ne.s32.totalorder %s129, %s130
      %p144 = scmp.eq.s32.totalorder %s28, 1
      %p145 = por %p143, %p144
      %p147 = scmp.ne.s32.totalorder %s130, %s146
      %p148 = scmp.eq.s32.totalorder %s28, 0
      %p149 = por %p147, %p148
      %s151 = sadd.s32 %s150, 1
      %p154 = scmp.eq.s32.totalorder %s22, 1
      %p155 = scmp.ne.s32.totalorder %s150, %s152
      %p156 = scmp.eq.s32.totalorder %s22, 0
      %p157 = por %p155, %p156
      %p158 = scmp.ne.s32.totalorder %s150, %s152
      %p159 = scmp.eq.s32.totalorder %s27, 1
      %p160 = por %p158, %p159
      %p161 = scmp.ne.s32.totalorder %s152, %s153
      %p162 = scmp.eq.s32.totalorder %s27, 0
      %p163 = por %p161, %p162
      %p164 = scmp.ne.s32.totalorder %s152, %s153
      %p165 = scmp.eq.s32.totalorder %s28, 1
      %p166 = por %p164, %p165
      %p168 = scmp.ne.s32.totalorder %s153, %s167
      %p169 = scmp.eq.s32.totalorder %s28, 0
      %p170 = por %p168, %p169
      %s172 = sadd.s32 %s171, 1
      %p175 = scmp.eq.s32.totalorder %s22, 1
      %p176 = scmp.ne.s32.totalorder %s171, %s173
      %p177 = scmp.eq.s32.totalorder %s22, 0
      %p178 = por %p176, %p177
      %p179 = scmp.ne.s32.totalorder %s171, %s173
      %p180 = scmp.eq.s32.totalorder %s27, 1
      %p181 = por %p179, %p180
      %p182 = scmp.ne.s32.totalorder %s173, %s174
      %p183 = scmp.eq.s32.totalorder %s27, 0
      %p184 = por %p182, %p183
      %p185 = scmp.ne.s32.totalorder %s173, %s174
      %p186 = scmp.eq.s32.totalorder %s28, 1
      %p187 = por %p185, %p186
      %p189 = scmp.ne.s32.totalorder %s174, %s188
      %p190 = scmp.eq.s32.totalorder %s28, 0
      %p191 = por %p189, %p190
      %s193 = sadd.s32 %s192, 1
      %p196 = scmp.eq.s32.totalorder %s22, 1
      %p197 = scmp.ne.s32.totalorder %s192, %s194
      %p198 = scmp.eq.s32.totalorder %s22, 0
      %p199 = por %p197, %p198
      %p200 = scmp.ne.s32.totalorder %s192, %s194
      %p201 = scmp.eq.s32.totalorder %s27, 1
      %p202 = por %p200, %p201
      %p203 = scmp.ne.s32.totalorder %s194, %s195
      %p204 = scmp.eq.s32.totalorder %s27, 0
      %p205 = por %p203, %p204
      %p206 = scmp.ne.s32.totalorder %s194, %s195
      %p207 = scmp.eq.s32.totalorder %s28, 1
      %p208 = por %p206, %p207
      %p210 = scmp.ne.s32.totalorder %s195, %s209
      %p211 = scmp.eq.s32.totalorder %s28, 0
      %p212 = por %p210, %p211
      %s214 = sadd.s32 %s213, 1
      %p217 = scmp.eq.s32.totalorder %s22, 1
      %p218 = scmp.ne.s32.totalorder %s213, %s215
      %p219 = scmp.eq.s32.totalorder %s22, 0
      %p220 = por %p218, %p219
      %p221 = scmp.ne.s32.totalorder %s213, %s215
      %p222 = scmp.eq.s32.totalorder %s27, 1
      %p223 = por %p221, %p222
      %p224 = scmp.ne.s32.totalorder %s215, %s216
      %p225 = scmp.eq.s32.totalorder %s27, 0
      %p226 = por %p224, %p225
      %p227 = scmp.ne.s32.totalorder %s215, %s216
      %p228 = scmp.eq.s32.totalorder %s28, 1
      %p229 = por %p227, %p228
      %p231 = scmp.ne.s32.totalorder %s216, %s230
      %p232 = scmp.eq.s32.totalorder %s28, 0
      %p233 = por %p231, %p232
      %s235 = sadd.s32 %s234, 1
      %p238 = scmp.eq.s32.totalorder %s22, 1
      %p239 = scmp.ne.s32.totalorder %s234, %s236
      %p240 = scmp.eq.s32.totalorder %s22, 0
      %p241 = por %p239, %p240
      %p242 = scmp.ne.s32.totalorder %s234, %s236
      %p243 = scmp.eq.s32.totalorder %s27, 1
      %p244 = por %p242, %p243
      %p245 = scmp.ne.s32.totalorder %s236, %s237
      %p246 = scmp.eq.s32.totalorder %s27, 0
      %p247 = por %p245, %p246
      %p248 = scmp.ne.s32.totalorder %s236, %s237
      %p249 = scmp.eq.s32.totalorder %s28, 1
      %p250 = por %p248, %p249
      %p252 = scmp.ne.s32.totalorder %s237, %s251
      %p253 = scmp.eq.s32.totalorder %s28, 0
      %p254 = por %p252, %p253
      %s256 = sadd.s32 %s255, 1
      %p259 = scmp.eq.s32.totalorder %s22, 1
      %p260 = scmp.ne.s32.totalorder %s255, %s257
      %p261 = scmp.eq.s32.totalorder %s22, 0
      %p262 = por %p260, %p261
      %p263 = scmp.ne.s32.totalorder %s255, %s257
      %p264 = scmp.eq.s32.totalorder %s27, 1
      %p265 = por %p263, %p264
      %p266 = scmp.ne.s32.totalorder %s257, %s258
      %p267 = scmp.eq.s32.totalorder %s27, 0
      %p268 = por %p266, %p267
      %p269 = scmp.ne.s32.totalorder %s257, %s258
      %p270 = scmp.eq.s32.totalorder %s28, 1
      %p271 = por %p269, %p270
      %p273 = scmp.ne.s32.totalorder %s258, %s272
      %p274 = scmp.eq.s32.totalorder %s28, 0
      %p275 = por %p273, %p274
      %s277 = sadd.s32 %s276, 1
      %p280 = scmp.eq.s32.totalorder %s22, 1
      %p281 = scmp.ne.s32.totalorder %s276, %s278
      %p282 = scmp.eq.s32.totalorder %s22, 0
      %p283 = por %p281, %p282
      %p284 = scmp.ne.s32.totalorder %s276, %s278
      %p285 = scmp.eq.s32.totalorder %s27, 1
      %p286 = por %p284, %p285
      %p287 = scmp.ne.s32.totalorder %s278, %s279
      %p288 = scmp.eq.s32.totalorder %s27, 0
      %p289 = por %p287, %p288
      %p290 = scmp.ne.s32.totalorder %s278, %s279
      %p291 = scmp.eq.s32.totalorder %s28, 1
      %p292 = por %p290, %p291
      %p294 = scmp.ne.s32.totalorder %s279, %s293
      %p295 = scmp.eq.s32.totalorder %s28, 0
      %p296 = por %p294, %p295
      %s298 = sadd.s32 %s297, 1
      %p301 = scmp.eq.s32.totalorder %s22, 1
      %p302 = scmp.ne.s32.totalorder %s297, %s299
      %p303 = scmp.eq.s32.totalorder %s22, 0
      %p304 = por %p302, %p303
      %p305 = scmp.ne.s32.totalorder %s297, %s299
      %p306 = scmp.eq.s32.totalorder %s27, 1
      %p307 = por %p305, %p306
      %p308 = scmp.ne.s32.totalorder %s299, %s300
      %p309 = scmp.eq.s32.totalorder %s27, 0
      %p310 = por %p308, %p309
      %p311 = scmp.ne.s32.totalorder %s299, %s300
      %p312 = scmp.eq.s32.totalorder %s28, 1
      %p313 = por %p311, %p312
      %p315 = scmp.ne.s32.totalorder %s300, %s314
      %p316 = scmp.eq.s32.totalorder %s28, 0
      %p317 = por %p315, %p316
      %s319 = sadd.s32 %s318, 1
      %p322 = scmp.eq.s32.totalorder %s22, 1
      %p323 = scmp.ne.s32.totalorder %s318, %s320
      %p324 = scmp.eq.s32.totalorder %s22, 0
      %p325 = por %p323, %p324
      %p326 = scmp.ne.s32.totalorder %s318, %s320
      %p327 = scmp.eq.s32.totalorder %s27, 1
      %p328 = por %p326, %p327
      %p329 = scmp.ne.s32.totalorder %s320, %s321
      %p330 = scmp.eq.s32.totalorder %s27, 0
      %p331 = por %p329, %p330
      %p332 = scmp.ne.s32.totalorder %s320, %s321
      %p333 = scmp.eq.s32.totalorder %s28, 1
      %p334 = por %p332, %p333
      %p336 = scmp.ne.s32.totalorder %s321, %s335
      %p337 = scmp.eq.s32.totalorder %s28, 0
      %p338 = por %p336, %p337
      %s339 = ssub.s32 %s29, %s41
      %s340 = ssub.s32 %s30, %s37
      %s341 = sor.u32 %s339, %s340
      %p342 = scmp.eq.s32.totalorder %s341, 0
      %s344 = sadd.s32 %s343, 1
      %s345 = scalar_select %p342, %s343, %s344
      %p348 = pneg %p342
      %p349 = scmp.eq.s32.totalorder %s22, 1
      %p350 = por %p348, %p349
      %p351 = scmp.ne.s32.totalorder %s343, %s346
      %p352 = scmp.eq.s32.totalorder %s22, 0
      %p353 = por %p351, %p352
      %p354 = scmp.ne.s32.totalorder %s343, %s346
      %p355 = scmp.eq.s32.totalorder %s27, 1
      %p356 = por %p354, %p355
      %p357 = scmp.ne.s32.totalorder %s346, %s347
      %p358 = scmp.eq.s32.totalorder %s27, 0
      %p359 = por %p357, %p358
      %p360 = scmp.ne.s32.totalorder %s346, %s347
      %p361 = scmp.eq.s32.totalorder %s28, 1
      %p362 = por %p360, %p361
      %p364 = scmp.ne.s32.totalorder %s347, %s363
      %p365 = scmp.eq.s32.totalorder %s28, 0
      %p366 = por %p364, %p365
      %p367 = scmp.le.s32.totalorder 1, %s22
      %p368 = scmp.lt.s32.totalorder %s22, 3
      %p369 = pnand %p367, %p368
      %p370 = pneg %p369
      // Predicated region
      $region9: #{tpu_custom_call.1} parent=5 // pred_check
        _
      $region10: #{tpu_custom_call.1} parent=5 // pred_check_branch
        %372 = sbr.rel (%p369) target = $region12
      $region11: #{tpu_custom_call.1} parent=5 // pred_region
        %s373 = ssub.s32 %s22, 1
        // Predicated region
        $region13: #{tpu_custom_call.1} parent=11 // pred_check
          %p374 = pneg %p163
        $region14: #{tpu_custom_call.1} parent=11 // pred_check_branch
          %376 = sbr.rel (%p374) target = $region16
        $region15: #{tpu_custom_call.1} parent=11 // pred_region
          _
        $region16: #{tpu_custom_call.1} parent=11 // pred_fallthru
          _
        // Predicated region
        $region17: #{tpu_custom_call.1} parent=11 // pred_check
          %p377 = pneg %p184
        $region18: #{tpu_custom_call.1} parent=11 // pred_check_branch
          %379 = sbr.rel (%p377) target = $region20
        $region19: #{tpu_custom_call.1} parent=11 // pred_region
          _
        $region20: #{tpu_custom_call.1} parent=11 // pred_fallthru
          _
        // Predicated region
        $region21: #{tpu_custom_call.1} parent=11 // pred_check
          %p380 = pneg %p205
        $region22: #{tpu_custom_call.1} parent=11 // pred_check_branch
          %382 = sbr.rel (%p380) target = $region24
        $region23: #{tpu_custom_call.1} parent=11 // pred_region
          _
        $region24: #{tpu_custom_call.1} parent=11 // pred_fallthru
          _
        // Predicated region
        $region25: #{tpu_custom_call.1} parent=11 // pred_check
          %p383 = pneg %p226
        $region26: #{tpu_custom_call.1} parent=11 // pred_check_branch
          %385 = sbr.rel (%p383) target = $region28
        $region27: #{tpu_custom_call.1} parent=11 // pred_region
          _
        $region28: #{tpu_custom_call.1} parent=11 // pred_fallthru
          _
        // Predicated region
        $region29: #{tpu_custom_call.1} parent=11 // pred_check
          %p386 = pneg %p247
        $region30: #{tpu_custom_call.1} parent=11 // pred_check_branch
          %388 = sbr.rel (%p386) target = $region32
        $region31: #{tpu_custom_call.1} parent=11 // pred_region
          _
        $region32: #{tpu_custom_call.1} parent=11 // pred_fallthru
          _
        // Predicated region
        $region33: #{tpu_custom_call.1} parent=11 // pred_check
          %p389 = pneg %p268
        $region34: #{tpu_custom_call.1} parent=11 // pred_check_branch
          %391 = sbr.rel (%p389) target = $region36
        $region35: #{tpu_custom_call.1} parent=11 // pred_region
          _
        $region36: #{tpu_custom_call.1} parent=11 // pred_fallthru
          _
        // Predicated region
        $region37: #{tpu_custom_call.1} parent=11 // pred_check
          %p392 = pneg %p289
        $region38: #{tpu_custom_call.1} parent=11 // pred_check_branch
          %394 = sbr.rel (%p392) target = $region40
        $region39: #{tpu_custom_call.1} parent=11 // pred_region
          _
        $region40: #{tpu_custom_call.1} parent=11 // pred_fallthru
          _
        // Predicated region
        $region41: #{tpu_custom_call.1} parent=11 // pred_check
          %p395 = pneg %p310
        $region42: #{tpu_custom_call.1} parent=11 // pred_check_branch
          %397 = sbr.rel (%p395) target = $region44
        $region43: #{tpu_custom_call.1} parent=11 // pred_region
          _
        $region44: #{tpu_custom_call.1} parent=11 // pred_fallthru
          _
        // Predicated region
        $region45: #{tpu_custom_call.1} parent=11 // pred_check
          %p398 = pneg %p331
        $region46: #{tpu_custom_call.1} parent=11 // pred_check_branch
          %400 = sbr.rel (%p398) target = $region48
        $region47: #{tpu_custom_call.1} parent=11 // pred_region
          _
        $region48: #{tpu_custom_call.1} parent=11 // pred_fallthru
          _
      $region12: #{tpu_custom_call.1} parent=5 // pred_fallthru
        _
      %p401 = scmp.lt.s32.totalorder %s22, 2
      // Predicated region
      $region49: #{tpu_custom_call.1} parent=5 // pred_check
        %p402 = pneg %p401
      $region50: #{tpu_custom_call.1} parent=5 // pred_check_branch
        %404 = sbr.rel (%p402) target = $region52
      $region51: #{tpu_custom_call.1} parent=5 // pred_region
        // Predicated region
        $region53: #{tpu_custom_call.1} parent=51 // pred_check
          %p405 = pneg %p56
        $region54: #{tpu_custom_call.1} parent=51 // pred_check_branch
          %407 = sbr.rel (%p405) target = $region56
        $region55: #{tpu_custom_call.1} parent=51 // pred_region
          %s408 = smul.u32 2, %s30
          %p409 = scmp.lt.s32.totalorder %s29, 1
          %s410 = scalar_select %p409, %s29, 1
          %p411 = scmp.lt.s32.totalorder %s408, 1
          %s412 = scalar_select %p411, %s408, 1
          %s413 = smul.addr %s410, 2
          %s414 = sadd.s32 %s412, %s413
          %s415 = smul.addr %s414, 8
          %s416 = scalar_lea.vmem %s0, %s415
          %s417 = smul.u32 2, %s30
        $region56: #{tpu_custom_call.1} parent=51 // pred_fallthru
          _
        // Predicated region
        $region57: #{tpu_custom_call.1} parent=51 // pred_check
          %p418 = pneg %p82
        $region58: #{tpu_custom_call.1} parent=51 // pred_check_branch
          %420 = sbr.rel (%p418) target = $region60
        $region59: #{tpu_custom_call.1} parent=51 // pred_region
          %p421 = scmp.lt.s32.totalorder %s29, 1
          %s422 = scalar_select %p421, %s29, 1
          %s423 = smul.addr %s422, 2
          %s424 = smul.addr %s423, 8
          %s425 = scalar_lea.vmem %s1, %s424
        $region60: #{tpu_custom_call.1} parent=51 // pred_fallthru
          _
        // Predicated region
        $region61: #{tpu_custom_call.1} parent=51 // pred_check
          %p426 = pneg %p108
        $region62: #{tpu_custom_call.1} parent=51 // pred_check_branch
          %428 = sbr.rel (%p426) target = $region64
        $region63: #{tpu_custom_call.1} parent=51 // pred_region
          %p429 = scmp.lt.s32.totalorder %s29, 1
          %s430 = scalar_select %p429, %s29, 1
          %s431 = smul.addr %s430, 2
          %s432 = smul.addr %s431, 8
          %s433 = scalar_lea.vmem %s2, %s432
        $region64: #{tpu_custom_call.1} parent=51 // pred_fallthru
          _
        // Predicated region
        $region65: #{tpu_custom_call.1} parent=51 // pred_check
          %p434 = pneg %p136
        $region66: #{tpu_custom_call.1} parent=51 // pred_check_branch
          %436 = sbr.rel (%p434) target = $region68
        $region67: #{tpu_custom_call.1} parent=51 // pred_region
          %s437 = smul.u32 2, %s30
          %p438 = scmp.lt.s32.totalorder %s29, 1
          %s439 = scalar_select %p438, %s29, 1
          %p440 = scmp.lt.s32.totalorder %s437, 1
          %s441 = scalar_select %p440, %s437, 1
          %s442 = smul.addr %s439, 2
          %s443 = sadd.s32 %s441, %s442
          %s444 = smul.addr %s443, 8
          %s445 = scalar_lea.vmem %s3, %s444
          %s446 = smul.u32 2, %s30
        $region68: #{tpu_custom_call.1} parent=51 // pred_fallthru
          _
      $region52: #{tpu_custom_call.1} parent=5 // pred_fallthru
        _
      %p447 = scmp.le.s32.totalorder 1, %s22
      %p448 = scmp.lt.s32.totalorder %s22, 3
      %p449 = pnand %p447, %p448
      %p450 = pneg %p449
      // Predicated region
      $region69: #{tpu_custom_call.1} parent=5 // pred_check
        _
      $region70: #{tpu_custom_call.1} parent=5 // pred_check_branch
        %452 = sbr.rel (%p449) target = $region72
      $region71: #{tpu_custom_call.1} parent=5 // pred_region
        %s453 = ssub.s32 %s22, 1
        %s454 = smul.u32 2, %s32
        %p455 = scmp.lt.s32.totalorder %s31, 1
        %s456 = scalar_select %p455, %s31, 1
        %p457 = scmp.lt.s32.totalorder %s454, 1
        %s458 = scalar_select %p457, %s454, 1
        %s459 = smul.addr %s456, 2
        %s460 = sadd.s32 %s458, %s459
        %s461 = smul.addr %s460, 8
        %s462 = scalar_lea.vmem %s0, %s461
        %p463 = pneg %p62
        %p464 = pneg %p59
        %p465 = scmp.lt.s32.totalorder %s31, 1
        %s466 = scalar_select %p465, %s31, 1
        %s467 = smul.addr %s466, 2
        %s468 = smul.addr %s467, 8
        %s469 = scalar_lea.vmem %s1, %s468
        %p470 = pneg %p88
        %p471 = pneg %p85
        %p472 = scmp.lt.s32.totalorder %s31, 1
        %s473 = scalar_select %p472, %s31, 1
        %s474 = smul.addr %s473, 2
        %s475 = smul.addr %s474, 8
        %s476 = scalar_lea.vmem %s2, %s475
        %p477 = pneg %p114
        %p478 = pneg %p111
        %s479 = smul.u32 2, %s32
        %p480 = scmp.lt.s32.totalorder %s31, 1
        %s481 = scalar_select %p480, %s31, 1
        %p482 = scmp.lt.s32.totalorder %s479, 1
        %s483 = scalar_select %p482, %s479, 1
        %s484 = smul.addr %s481, 2
        %s485 = sadd.s32 %s483, %s484
        %s486 = smul.addr %s485, 8
        %s487 = scalar_lea.vmem %s3, %s486
        %p488 = pneg %p142
        %p489 = pneg %p139
        %p490 = pneg %p163
        %p491 = pneg %p160
        %p492 = pneg %p184
        %p493 = pneg %p181
        %p494 = pneg %p205
        %p495 = pneg %p202
        %p496 = pneg %p226
        %p497 = pneg %p223
        %p498 = pneg %p247
        %p499 = pneg %p244
        %p500 = pneg %p268
        %p501 = pneg %p265
        %p502 = pneg %p289
        %p503 = pneg %p286
        %p504 = pneg %p310
        %p505 = pneg %p307
        %p506 = pneg %p331
        %p507 = pneg %p328
        %p508 = pneg %p359
        %p509 = pneg %p356
        %s510 = sand.u32 %s346, 1
        %s511 = scalar_lea.sflag [#allocation3], %s510
        %s512 = sand.u32 %s346, 1
        %s513 = smul.addr %s512, 16
        %s514 = scalar_lea.vmem [#allocation2], %s513
        %s515 = smul.u32 2, %s32
        %p516 = scmp.lt.s32.totalorder %s31, 1
        %s517 = scalar_select %p516, %s31, 1
        %p518 = scmp.lt.s32.totalorder %s515, 1
        %s519 = scalar_select %p518, %s515, 1
        %s520 = smul.addr %s517, 2
        %s521 = sadd.s32 %s519, %s520
        %s522 = smul.addr %s521, 8
        %s523 = scalar_lea.vmem %s0, %s522
        %s524 = smul.u32 2, %s32
        %p525 = scmp.lt.s32.totalorder %s31, 1
        %s526 = scalar_select %p525, %s31, 1
        %s527 = smul.addr %s526, 2
        %s528 = smul.addr %s527, 8
        %s529 = scalar_lea.vmem %s1, %s528
        %p530 = scmp.lt.s32.totalorder %s31, 1
        %s531 = scalar_select %p530, %s31, 1
        %s532 = smul.addr %s531, 2
        %s533 = smul.addr %s532, 8
        %s534 = scalar_lea.vmem %s2, %s533
        %s535 = smul.u32 2, %s32
        %p536 = scmp.lt.s32.totalorder %s31, 1
        %s537 = scalar_select %p536, %s31, 1
        %p538 = scmp.lt.s32.totalorder %s535, 1
        %s539 = scalar_select %p538, %s535, 1
        %s540 = smul.addr %s537, 2
        %s541 = sadd.s32 %s539, %s540
        %s542 = smul.addr %s541, 8
        %s543 = scalar_lea.vmem %s3, %s542
        %s544 = smul.u32 2, %s32
        %s545 = smul.u32 2, %s32
        %v546 = vld [vmem:[%s523] sm:$0xff]
        %v547 = vld [vmem:[%s523 + $0x8] sm:$0xff]
        %v548 = vld [vmem:[%s529] sm:$0xff]
        %v549 = vld [vmem:[%s529 + $0x8] sm:$0xff]
        %v550 = vld [vmem:[%s534] sm:$0xff]
        %v551 = vld [vmem:[%s534 + $0x8] sm:$0xff]
        %v552 = vld [vmem:[%s543] sm:$0xff]
        %v553 = vld [vmem:[%s543 + $0x8] sm:$0xff]
        %v554 = vld [vmem:[%s4] sm:$0xff]
        %v555 = vld [vmem:[%s5] sm:$0x1]
        %v557 = vlaneseq
        %v558 = vshrl.u32 %v557, 7
        %v559 = vsub.s32 0, %v558
        %v560 = vrot.slane %v555, %v559
        %vm562 = vcmask 64512
        %v564 = vsel %vm562, %v546, 0
        %v567 = vsel %vm562, %v547, 0
        %569 = vmatprep.subr.mxu0 0.0
        %570 = vmatpush1.msra.mxu0 0.0
        %571 = vmatprep.subr.mxu0 0.0
        %572 = vmatpush1.msra.mxu0 0.0
        %573 = vmatprep.subr.mxu0 0.0
        %574 = vmatpush1.msra.mxu0 0.0
        %575 = vmatprep.subr.mxu0 0.0
        %576 = vmatpush1.msra.mxu0 0.0
        %577 = vmatprep.subr.mxu0 0.0
        %578 = vmatpush1.msra.mxu0 0.0
        %579 = vmatprep.subr.mxu0 0.0
        %580 = vmatpush1.msra.mxu0 0.0
        %581 = vmatprep.subr.mxu0 0.0
        %582 = vmatpush1.msra.mxu0 0.0
        %583 = vmatprep.subr.mxu0 0.0
        %584 = vmatpush1.msra.mxu0 0.0
        %585 = vmatprep.subr.mxu0 0.0
        %586 = vmatpush1.msra.mxu0 0.0
        %587 = vmatprep.subr.mxu0 0.0
        %588 = vmatpush1.msra.mxu0 0.0
        %589 = vmatprep.subr.mxu0 0.0
        %590 = vmatpush1.msra.mxu0 0.0
        %591 = vmatprep.subr.mxu0 0.0
        %592 = vmatpush1.msra.mxu0 0.0
        %593 = vmatprep.subr.mxu0 0.0
        %594 = vmatpush1.msra.mxu0 0.0
        %595 = vmatprep.subr.mxu0 0.0
        %596 = vmatpush1.msra.mxu0 0.0
        %597 = vmatprep.subr.mxu0 0.0
        %598 = vmatpush1.msra.mxu0 0.0
        %599 = vmatprep.subr.mxu0 0.0
        %600 = vmatpush1.msra.mxu0 %v554
        %601 = vmatprep.subr.mxu0 0.0
        %602 = vmatpush2.msra.mxu0 0.0
        %603 = vmatprep.subr.mxu0 0.0
        %604 = vmatpush2.msra.mxu0 0.0
        %605 = vmatprep.subr.mxu0 0.0
        %606 = vmatpush2.msra.mxu0 0.0
        %607 = vmatprep.subr.mxu0 0.0
        %608 = vmatpush2.msra.mxu0 0.0
        %609 = vmatprep.subr.mxu0 0.0
        %610 = vmatpush2.msra.mxu0 0.0
        %611 = vmatprep.subr.mxu0 0.0
        %612 = vmatpush2.msra.mxu0 0.0
        %613 = vmatprep.subr.mxu0 0.0
        %614 = vmatpush2.msra.mxu0 0.0
        %615 = vmatprep.subr.mxu0 0.0
        %616 = vmatpush2.msra.mxu0 0.0
        %617 = vmatprep.subr.mxu0 0.0
        %618 = vmatpush2.msra.mxu0 0.0
        %619 = vmatprep.subr.mxu0 0.0
        %620 = vmatpush2.msra.mxu0 0.0
        %621 = vmatprep.subr.mxu0 0.0
        %622 = vmatpush2.msra.mxu0 0.0
        %623 = vmatprep.subr.mxu0 0.0
        %624 = vmatpush2.msra.mxu0 0.0
        %625 = vmatprep.subr.mxu0 0.0
        %626 = vmatpush2.msra.mxu0 0.0
        %627 = vmatprep.subr.mxu0 0.0
        %628 = vmatpush2.msra.mxu0 0.0
        %629 = vmatprep.subr.mxu0 0.0
        %630 = vmatpush2.msra.mxu0 0.0
        %631 = vmatprep.subr.mxu0 0.0
        %632 = vmatpush2.msra.mxu0 0.0
        %633 = vmatprep.mubr.f32.mxu0 0.0
        %634 = vmatmul.mubr.f32.gmra.mxu0 %v564
        %v635 = vpop.f32.mrf.mxu0
        %v636 = vadd.f32 %v560, %v635
        %v637 = vpop.f32.mrf.mxu0
        %638 = vmatprep.mubr.f32.mxu0 0.0
        %639 = vmatmul.mubr.f32.gmra.mxu0 %v567
        %v640 = vpop.f32.mrf.mxu0
        %v641 = vadd.f32 %v560, %v640
        %v642 = vpop.f32.mrf.mxu0
        %643 = vdwg.mxu0
        %v644 = vld [vmem:[%s6] sm:$0xff]
        %v645 = vld [vmem:[%s7] sm:$0x1]
        %v647 = vlaneseq
        %v648 = vshrl.u32 %v647, 7
        %v649 = vsub.s32 0, %v648
        %v650 = vrot.slane %v645, %v649
        %v653 = vsel %vm562, %v548, 0
        %v656 = vsel %vm562, %v549, 0
        %658 = vmatprep.subr.mxu0 0.0
        %659 = vmatpush1.msra.mxu0 0.0
        %660 = vmatprep.subr.mxu0 0.0
        %661 = vmatpush1.msra.mxu0 0.0
        %662 = vmatprep.subr.mxu0 0.0
        %663 = vmatpush1.msra.mxu0 0.0
        %664 = vmatprep.subr.mxu0 0.0
        %665 = vmatpush1.msra.mxu0 0.0
        %666 = vmatprep.subr.mxu0 0.0
        %667 = vmatpush1.msra.mxu0 0.0
        %668 = vmatprep.subr.mxu0 0.0
        %669 = vmatpush1.msra.mxu0 0.0
        %670 = vmatprep.subr.mxu0 0.0
        %671 = vmatpush1.msra.mxu0 0.0
        %672 = vmatprep.subr.mxu0 0.0
        %673 = vmatpush1.msra.mxu0 0.0
        %674 = vmatprep.subr.mxu0 0.0
        %675 = vmatpush1.msra.mxu0 0.0
        %676 = vmatprep.subr.mxu0 0.0
        %677 = vmatpush1.msra.mxu0 0.0
        %678 = vmatprep.subr.mxu0 0.0
        %679 = vmatpush1.msra.mxu0 0.0
        %680 = vmatprep.subr.mxu0 0.0
        %681 = vmatpush1.msra.mxu0 0.0
        %682 = vmatprep.subr.mxu0 0.0
        %683 = vmatpush1.msra.mxu0 0.0
        %684 = vmatprep.subr.mxu0 0.0
        %685 = vmatpush1.msra.mxu0 0.0
        %686 = vmatprep.subr.mxu0 0.0
        %687 = vmatpush1.msra.mxu0 0.0
        %688 = vmatprep.subr.mxu0 0.0
        %689 = vmatpush1.msra.mxu0 %v644
        %690 = vmatprep.subr.mxu0 0.0
        %691 = vmatpush2.msra.mxu0 0.0
        %692 = vmatprep.subr.mxu0 0.0
        %693 = vmatpush2.msra.mxu0 0.0
        %694 = vmatprep.subr.mxu0 0.0
        %695 = vmatpush2.msra.mxu0 0.0
        %696 = vmatprep.subr.mxu0 0.0
        %697 = vmatpush2.msra.mxu0 0.0
        %698 = vmatprep.subr.mxu0 0.0
        %699 = vmatpush2.msra.mxu0 0.0
        %700 = vmatprep.subr.mxu0 0.0
        %701 = vmatpush2.msra.mxu0 0.0
        %702 = vmatprep.subr.mxu0 0.0
        %703 = vmatpush2.msra.mxu0 0.0
        %704 = vmatprep.subr.mxu0 0.0
        %705 = vmatpush2.msra.mxu0 0.0
        %706 = vmatprep.subr.mxu0 0.0
        %707 = vmatpush2.msra.mxu0 0.0
        %708 = vmatprep.subr.mxu0 0.0
        %709 = vmatpush2.msra.mxu0 0.0
        %710 = vmatprep.subr.mxu0 0.0
        %711 = vmatpush2.msra.mxu0 0.0
        %712 = vmatprep.subr.mxu0 0.0
        %713 = vmatpush2.msra.mxu0 0.0
        %714 = vmatprep.subr.mxu0 0.0
        %715 = vmatpush2.msra.mxu0 0.0
        %716 = vmatprep.subr.mxu0 0.0
        %717 = vmatpush2.msra.mxu0 0.0
        %718 = vmatprep.subr.mxu0 0.0
        %719 = vmatpush2.msra.mxu0 0.0
        %720 = vmatprep.subr.mxu0 0.0
        %721 = vmatpush2.msra.mxu0 0.0
        %722 = vmatprep.mubr.f32.mxu0 0.0
        %723 = vmatmul.mubr.f32.gmra.mxu0 %v653
        %v724 = vpop.f32.mrf.mxu0
        %v725 = vadd.f32 %v650, %v724
        %v726 = vpop.f32.mrf.mxu0
        %727 = vmatprep.mubr.f32.mxu0 0.0
        %728 = vmatmul.mubr.f32.gmra.mxu0 %v656
        %v729 = vpop.f32.mrf.mxu0
        %v730 = vadd.f32 %v650, %v729
        %v731 = vpop.f32.mrf.mxu0
        %732 = vdwg.mxu0
        %v733 = vld [vmem:[%s8] sm:$0xff]
        %v734 = vld [vmem:[%s9] sm:$0x1]
        %v736 = vlaneseq
        %v737 = vshrl.u32 %v736, 7
        %v738 = vsub.s32 0, %v737
        %v739 = vrot.slane %v734, %v738
        %v742 = vsel %vm562, %v550, 0
        %v745 = vsel %vm562, %v551, 0
        %747 = vmatprep.subr.mxu0 0.0
        %748 = vmatpush1.msra.mxu0 0.0
        %749 = vmatprep.subr.mxu0 0.0
        %750 = vmatpush1.msra.mxu0 0.0
        %751 = vmatprep.subr.mxu0 0.0
        %752 = vmatpush1.msra.mxu0 0.0
        %753 = vmatprep.subr.mxu0 0.0
        %754 = vmatpush1.msra.mxu0 0.0
        %755 = vmatprep.subr.mxu0 0.0
        %756 = vmatpush1.msra.mxu0 0.0
        %757 = vmatprep.subr.mxu0 0.0
        %758 = vmatpush1.msra.mxu0 0.0
        %759 = vmatprep.subr.mxu0 0.0
        %760 = vmatpush1.msra.mxu0 0.0
        %761 = vmatprep.subr.mxu0 0.0
        %762 = vmatpush1.msra.mxu0 0.0
        %763 = vmatprep.subr.mxu0 0.0
        %764 = vmatpush1.msra.mxu0 0.0
        %765 = vmatprep.subr.mxu0 0.0
        %766 = vmatpush1.msra.mxu0 0.0
        %767 = vmatprep.subr.mxu0 0.0
        %768 = vmatpush1.msra.mxu0 0.0
        %769 = vmatprep.subr.mxu0 0.0
        %770 = vmatpush1.msra.mxu0 0.0
        %771 = vmatprep.subr.mxu0 0.0
        %772 = vmatpush1.msra.mxu0 0.0
        %773 = vmatprep.subr.mxu0 0.0
        %774 = vmatpush1.msra.mxu0 0.0
        %775 = vmatprep.subr.mxu0 0.0
        %776 = vmatpush1.msra.mxu0 0.0
        %777 = vmatprep.subr.mxu0 0.0
        %778 = vmatpush1.msra.mxu0 %v733
        %779 = vmatprep.subr.mxu0 0.0
        %780 = vmatpush2.msra.mxu0 0.0
        %781 = vmatprep.subr.mxu0 0.0
        %782 = vmatpush2.msra.mxu0 0.0
        %783 = vmatprep.subr.mxu0 0.0
        %784 = vmatpush2.msra.mxu0 0.0
        %785 = vmatprep.subr.mxu0 0.0
        %786 = vmatpush2.msra.mxu0 0.0
        %787 = vmatprep.subr.mxu0 0.0
        %788 = vmatpush2.msra.mxu0 0.0
        %789 = vmatprep.subr.mxu0 0.0
        %790 = vmatpush2.msra.mxu0 0.0
        %791 = vmatprep.subr.mxu0 0.0
        %792 = vmatpush2.msra.mxu0 0.0
        %793 = vmatprep.subr.mxu0 0.0
        %794 = vmatpush2.msra.mxu0 0.0
        %795 = vmatprep.subr.mxu0 0.0
        %796 = vmatpush2.msra.mxu0 0.0
        %797 = vmatprep.subr.mxu0 0.0
        %798 = vmatpush2.msra.mxu0 0.0
        %799 = vmatprep.subr.mxu0 0.0
        %800 = vmatpush2.msra.mxu0 0.0
        %801 = vmatprep.subr.mxu0 0.0
        %802 = vmatpush2.msra.mxu0 0.0
        %803 = vmatprep.subr.mxu0 0.0
        %804 = vmatpush2.msra.mxu0 0.0
        %805 = vmatprep.subr.mxu0 0.0
        %806 = vmatpush2.msra.mxu0 0.0
        %807 = vmatprep.subr.mxu0 0.0
        %808 = vmatpush2.msra.mxu0 0.0
        %809 = vmatprep.subr.mxu0 0.0
        %810 = vmatpush2.msra.mxu0 0.0
        %811 = vmatprep.mubr.f32.mxu0 0.0
        %812 = vmatmul.mubr.f32.gmra.mxu0 %v742
        %v813 = vpop.f32.mrf.mxu0
        %v814 = vadd.f32 %v739, %v813
        %v815 = vpop.f32.mrf.mxu0
        %816 = vmatprep.mubr.f32.mxu0 0.0
        %817 = vmatmul.mubr.f32.gmra.mxu0 %v745
        %v818 = vpop.f32.mrf.mxu0
        %v819 = vadd.f32 %v739, %v818
        %v820 = vpop.f32.mrf.mxu0
        %821 = vdwg.mxu0
        %v822 = vxor.u32 %v636, 2147483648
        %v823 = vxor.u32 %v641, 2147483648
        %v824 = vmul.f32 %v822, 1.442695
        %v825 = vpow.pop %v824
        %v826 = vmul.f32 %v823, 1.442695
        %v827 = vpow.pop %v826
        %v828 = vadd.f32 %v825, 1.0
        %v829 = vadd.f32 %v827, 1.0
        %v830 = vrcp.pop %v828
        %v831 = vmul.f32 1.0, %v830
        %v832 = vrcp.pop %v829
        %v833 = vmul.f32 1.0, %v832
        %v834 = vxor.u32 %v725, 2147483648
        %v835 = vxor.u32 %v730, 2147483648
        %v836 = vmul.f32 %v834, 1.442695
        %v837 = vpow.pop %v836
        %v838 = vmul.f32 %v835, 1.442695
        %v839 = vpow.pop %v838
        %v840 = vadd.f32 %v837, 1.0
        %v841 = vadd.f32 %v839, 1.0
        %v842 = vrcp.pop %v840
        %v843 = vmul.f32 1.0, %v842
        %v844 = vrcp.pop %v841
        %v845 = vmul.f32 1.0, %v844
        %v846 = vld [vmem:[%s12] sm:$0xff]
        %v847 = vld [vmem:[%s12 + $0x8] sm:$0xff]
        %v848 = vld [vmem:[%s12 + $0x10] sm:$0xff]
        %v849 = vld [vmem:[%s12 + $0x18] sm:$0xff]
        %850 = vxpose.xlu0.b32.start [1/16] %v843, 128
        %851 = vxpose.xlu0.b32.cont [2/16] %v845, 128
        %852 = vxpose.xlu0.b32.cont [3/16] 0.0, 128
        %853 = vxpose.xlu0.b32.cont [4/16] 0.0, 128
        %854 = vxpose.xlu0.b32.cont [5/16] 0.0, 128
        %855 = vxpose.xlu0.b32.cont [6/16] 0.0, 128
        %856 = vxpose.xlu0.b32.cont [7/16] 0.0, 128
        %857 = vxpose.xlu0.b32.cont [8/16] 0.0, 128
        %858 = vxpose.xlu0.b32.cont [9/16] 0.0, 128
        %859 = vxpose.xlu0.b32.cont [10/16] 0.0, 128
        %860 = vxpose.xlu0.b32.cont [11/16] 0.0, 128
        %861 = vxpose.xlu0.b32.cont [12/16] 0.0, 128
        %862 = vxpose.xlu0.b32.cont [13/16] 0.0, 128
        %863 = vxpose.xlu0.b32.cont [14/16] 0.0, 128
        %864 = vxpose.xlu0.b32.cont [15/16] 0.0, 128
        %865 = vxpose.xlu0.b32.end [16/16] 0.0, 128
        %v866 = vpop.trf.xlu0
        %v867 = vpop.trf.xlu0
        %v868 = vpop.trf.xlu0
        %v869 = vpop.trf.xlu0
        %v870 = vpop.trf.xlu0
        %v871 = vpop.trf.xlu0
        %v872 = vpop.trf.xlu0
        %v873 = vpop.trf.xlu0
        %v874 = vpop.trf.xlu0
        %v875 = vpop.trf.xlu0
        %v876 = vpop.trf.xlu0
        %v877 = vpop.trf.xlu0
        %v878 = vpop.trf.xlu0
        %v879 = vpop.trf.xlu0
        %v880 = vpop.trf.xlu0
        %v881 = vpop.trf.xlu0
        %vm882 = vcmask 130048
        %v884 = vsel %vm882, %v866, 0
        %v887 = vsel %vm882, %v867, 0
        %v890 = vsel %vm882, %v868, 0
        %v893 = vsel %vm882, %v869, 0
        %895 = vmatprep.subr.mxu0 0.0
        %896 = vmatpush1.msra.mxu0 0.0
        %897 = vmatprep.subr.mxu0 0.0
        %898 = vmatpush1.msra.mxu0 0.0
        %899 = vmatprep.subr.mxu0 0.0
        %900 = vmatpush1.msra.mxu0 0.0
        %901 = vmatprep.subr.mxu0 0.0
        %902 = vmatpush1.msra.mxu0 0.0
        %903 = vmatprep.subr.mxu0 0.0
        %904 = vmatpush1.msra.mxu0 0.0
        %905 = vmatprep.subr.mxu0 0.0
        %906 = vmatpush1.msra.mxu0 0.0
        %907 = vmatprep.subr.mxu0 0.0
        %908 = vmatpush1.msra.mxu0 0.0
        %909 = vmatprep.subr.mxu0 0.0
        %910 = vmatpush1.msra.mxu0 0.0
        %911 = vmatprep.subr.mxu0 0.0
        %912 = vmatpush1.msra.mxu0 0.0
        %913 = vmatprep.subr.mxu0 0.0
        %914 = vmatpush1.msra.mxu0 0.0
        %915 = vmatprep.subr.mxu0 0.0
        %916 = vmatpush1.msra.mxu0 0.0
        %917 = vmatprep.subr.mxu0 0.0
        %918 = vmatpush1.msra.mxu0 0.0
        %919 = vmatprep.subr.mxu0 0.0
        %920 = vmatpush1.msra.mxu0 0.0
        %921 = vmatprep.subr.mxu0 0.0
        %922 = vmatpush1.msra.mxu0 0.0
        %923 = vmatprep.subr.mxu0 0.0
        %924 = vmatpush1.msra.mxu0 %v819
        %925 = vmatprep.subr.mxu0 0.0
        %926 = vmatpush1.msra.mxu0 %v814
        %927 = vmatprep.subr.mxu0 0.0
        %928 = vmatpush2.msra.mxu0 0.0
        %929 = vmatprep.subr.mxu0 0.0
        %930 = vmatpush2.msra.mxu0 0.0
        %931 = vmatprep.subr.mxu0 0.0
        %932 = vmatpush2.msra.mxu0 0.0
        %933 = vmatprep.subr.mxu0 0.0
        %934 = vmatpush2.msra.mxu0 0.0
        %935 = vmatprep.subr.mxu0 0.0
        %936 = vmatpush2.msra.mxu0 0.0
        %937 = vmatprep.subr.mxu0 0.0
        %938 = vmatpush2.msra.mxu0 0.0
        %939 = vmatprep.subr.mxu0 0.0
        %940 = vmatpush2.msra.mxu0 0.0
        %941 = vmatprep.subr.mxu0 0.0
        %942 = vmatpush2.msra.mxu0 0.0
        %943 = vmatprep.subr.mxu0 0.0
        %944 = vmatpush2.msra.mxu0 0.0
        %945 = vmatprep.subr.mxu0 0.0
        %946 = vmatpush2.msra.mxu0 0.0
        %947 = vmatprep.subr.mxu0 0.0
        %948 = vmatpush2.msra.mxu0 0.0
        %949 = vmatprep.subr.mxu0 0.0
        %950 = vmatpush2.msra.mxu0 0.0
        %951 = vmatprep.subr.mxu0 0.0
        %952 = vmatpush2.msra.mxu0 0.0
        %953 = vmatprep.subr.mxu0 0.0
        %954 = vmatpush2.msra.mxu0 0.0
        %955 = vmatprep.subr.mxu0 0.0
        %956 = vmatpush2.msra.mxu0 0.0
        %957 = vmatprep.subr.mxu0 0.0
        %958 = vmatpush2.msra.mxu0 0.0
        %959 = vmatprep.mubr.f32.mxu0 0.0
        %960 = vmatmul.mubr.f32.gmra.mxu0 %v884
        %v961 = vpop.f32.mrf.mxu0
        %v962 = vadd.f32 0.0, %v961
        %v963 = vpop.f32.mrf.mxu0
        %964 = vmatprep.mubr.f32.mxu0 0.0
        %965 = vmatmul.mubr.f32.gmra.mxu0 %v887
        %v966 = vpop.f32.mrf.mxu0
        %v967 = vadd.f32 0.0, %v966
        %v968 = vpop.f32.mrf.mxu0
        %969 = vmatprep.mubr.f32.mxu0 0.0
        %970 = vmatmul.mubr.f32.gmra.mxu0 %v890
        %v971 = vpop.f32.mrf.mxu0
        %v972 = vadd.f32 0.0, %v971
        %v973 = vpop.f32.mrf.mxu0
        %974 = vmatprep.mubr.f32.mxu0 0.0
        %975 = vmatmul.mubr.f32.gmra.mxu0 %v893
        %v976 = vpop.f32.mrf.mxu0
        %v977 = vadd.f32 0.0, %v976
        %v978 = vpop.f32.mrf.mxu0
        %979 = vdwg.mxu0
        %v980 = vmul.f32 %v962, %v846
        %v981 = vmul.f32 %v967, %v847
        %v982 = vmul.f32 %v972, %v848
        %v983 = vmul.f32 %v977, %v849
        %vm984 = vcmask 261120
        %v985 = vsel %vm984, %v843, 0.0
        %v986 = vsel %vm984, %v845, 0.0
        %v987 = vadd.f32 %v985, %v986
        %v988 = vrot.slane %v987, 4
        %v989 = vadd.f32 %v987, %v988
        %v990 = vrot.slane %v989, 2
        %v991 = vadd.f32 %v989, %v990
        %v992 = vrot.slane %v991, 1
        %v993 = vadd.f32 %v991, %v992
        %v994 = vadd.f32 %v993, 1e-06
        %v995 = vmul.f32 %v831, %v994
        %v996 = vmul.f32 %v833, %v994
        %v998 = vsel %vm984, %v995, 0
        %v1001 = vsel %vm984, %v996, 0
        %1003 = vmatprep.subr.mxu0 0.0
        %1004 = vmatpush1.msra.mxu0 0.0
        %1005 = vmatprep.subr.mxu0 0.0
        %1006 = vmatpush1.msra.mxu0 0.0
        %1007 = vmatprep.subr.mxu0 0.0
        %1008 = vmatpush1.msra.mxu0 0.0
        %1009 = vmatprep.subr.mxu0 0.0
        %1010 = vmatpush1.msra.mxu0 0.0
        %1011 = vmatprep.subr.mxu0 0.0
        %1012 = vmatpush1.msra.mxu0 0.0
        %1013 = vmatprep.subr.mxu0 0.0
        %1014 = vmatpush1.msra.mxu0 0.0
        %1015 = vmatprep.subr.mxu0 0.0
        %1016 = vmatpush1.msra.mxu0 0.0
        %1017 = vmatprep.subr.mxu0 0.0
        %1018 = vmatpush1.msra.mxu0 0.0
        %1019 = vmatprep.subr.mxu0 0.0
        %1020 = vmatpush1.msra.mxu0 0.0
        %1021 = vmatprep.subr.mxu0 0.0
        %1022 = vmatpush1.msra.mxu0 0.0
        %1023 = vmatprep.subr.mxu0 0.0
        %1024 = vmatpush1.msra.mxu0 0.0
        %1025 = vmatprep.subr.mxu0 0.0
        %1026 = vmatpush1.msra.mxu0 0.0
        %1027 = vmatprep.subr.mxu0 0.0
        %1028 = vmatpush1.msra.mxu0 %v849
        %1029 = vmatprep.subr.mxu0 0.0
        %1030 = vmatpush1.msra.mxu0 %v848
        %1031 = vmatprep.subr.mxu0 0.0
        %1032 = vmatpush1.msra.mxu0 %v847
        %1033 = vmatprep.subr.mxu0 0.0
        %1034 = vmatpush1.msra.mxu0 %v846
        %1035 = vmatprep.subr.mxu0 0.0
        %1036 = vmatpush2.msra.mxu0 0.0
        %1037 = vmatprep.subr.mxu0 0.0
        %1038 = vmatpush2.msra.mxu0 0.0
        %1039 = vmatprep.subr.mxu0 0.0
        %1040 = vmatpush2.msra.mxu0 0.0
        %1041 = vmatprep.subr.mxu0 0.0
        %1042 = vmatpush2.msra.mxu0 0.0
        %1043 = vmatprep.subr.mxu0 0.0
        %1044 = vmatpush2.msra.mxu0 0.0
        %1045 = vmatprep.subr.mxu0 0.0
        %1046 = vmatpush2.msra.mxu0 0.0
        %1047 = vmatprep.subr.mxu0 0.0
        %1048 = vmatpush2.msra.mxu0 0.0
        %1049 = vmatprep.subr.mxu0 0.0
        %1050 = vmatpush2.msra.mxu0 0.0
        %1051 = vmatprep.subr.mxu0 0.0
        %1052 = vmatpush2.msra.mxu0 0.0
        %1053 = vmatprep.subr.mxu0 0.0
        %1054 = vmatpush2.msra.mxu0 0.0
        %1055 = vmatprep.subr.mxu0 0.0
        %1056 = vmatpush2.msra.mxu0 0.0
        %1057 = vmatprep.subr.mxu0 0.0
        %1058 = vmatpush2.msra.mxu0 0.0
        %1059 = vmatprep.subr.mxu0 0.0
        %1060 = vmatpush2.msra.mxu0 0.0
        %1061 = vmatprep.subr.mxu0 0.0
        %1062 = vmatpush2.msra.mxu0 0.0
        %1063 = vmatprep.subr.mxu0 0.0
        %1064 = vmatpush2.msra.mxu0 0.0
        %1065 = vmatprep.subr.mxu0 0.0
        %1066 = vmatpush2.msra.mxu0 0.0
        %1067 = vmatprep.mubr.f32.mxu0 0.0
        %1068 = vmatmul.mubr.f32.gmra.mxu0 %v998
        %v1069 = vpop.f32.mrf.mxu0
        %v1070 = vadd.f32 0.0, %v1069
        %v1071 = vpop.f32.mrf.mxu0
        %1072 = vmatprep.mubr.f32.mxu0 0.0
        %1073 = vmatmul.mubr.f32.gmra.mxu0 %v1001
        %v1074 = vpop.f32.mrf.mxu0
        %v1075 = vadd.f32 0.0, %v1074
        %v1076 = vpop.f32.mrf.mxu0
        %1077 = vdwg.mxu0
        %v1078 = vrcp.pop %v1070
        %v1079 = vrcp.pop %v1075
        %v1081 = vsel %vm984, %v831, 0
        %v1084 = vsel %vm984, %v833, 0
        %1086 = vmatprep.subr.mxu0 0.0
        %1087 = vmatpush1.msra.mxu0 0.0
        %1088 = vmatprep.subr.mxu0 0.0
        %1089 = vmatpush1.msra.mxu0 0.0
        %1090 = vmatprep.subr.mxu0 0.0
        %1091 = vmatpush1.msra.mxu0 0.0
        %1092 = vmatprep.subr.mxu0 0.0
        %1093 = vmatpush1.msra.mxu0 0.0
        %1094 = vmatprep.subr.mxu0 0.0
        %1095 = vmatpush1.msra.mxu0 0.0
        %1096 = vmatprep.subr.mxu0 0.0
        %1097 = vmatpush1.msra.mxu0 0.0
        %1098 = vmatprep.subr.mxu0 0.0
        %1099 = vmatpush1.msra.mxu0 0.0
        %1100 = vmatprep.subr.mxu0 0.0
        %1101 = vmatpush1.msra.mxu0 0.0
        %1102 = vmatprep.subr.mxu0 0.0
        %1103 = vmatpush1.msra.mxu0 0.0
        %1104 = vmatprep.subr.mxu0 0.0
        %1105 = vmatpush1.msra.mxu0 0.0
        %1106 = vmatprep.subr.mxu0 0.0
        %1107 = vmatpush1.msra.mxu0 0.0
        %1108 = vmatprep.subr.mxu0 0.0
        %1109 = vmatpush1.msra.mxu0 0.0
        %1110 = vmatprep.subr.mxu0 0.0
        %1111 = vmatpush1.msra.mxu0 %v983
        %1112 = vmatprep.subr.mxu0 0.0
        %1113 = vmatpush1.msra.mxu0 %v982
        %1114 = vmatprep.subr.mxu0 0.0
        %1115 = vmatpush1.msra.mxu0 %v981
        %1116 = vmatprep.subr.mxu0 0.0
        %1117 = vmatpush1.msra.mxu0 %v980
        %1118 = vmatprep.subr.mxu0 0.0
        %1119 = vmatpush2.msra.mxu0 0.0
        %1120 = vmatprep.subr.mxu0 0.0
        %1121 = vmatpush2.msra.mxu0 0.0
        %1122 = vmatprep.subr.mxu0 0.0
        %1123 = vmatpush2.msra.mxu0 0.0
        %1124 = vmatprep.subr.mxu0 0.0
        %1125 = vmatpush2.msra.mxu0 0.0
        %1126 = vmatprep.subr.mxu0 0.0
        %1127 = vmatpush2.msra.mxu0 0.0
        %1128 = vmatprep.subr.mxu0 0.0
        %1129 = vmatpush2.msra.mxu0 0.0
        %1130 = vmatprep.subr.mxu0 0.0
        %1131 = vmatpush2.msra.mxu0 0.0
        %1132 = vmatprep.subr.mxu0 0.0
        %1133 = vmatpush2.msra.mxu0 0.0
        %1134 = vmatprep.subr.mxu0 0.0
        %1135 = vmatpush2.msra.mxu0 0.0
        %1136 = vmatprep.subr.mxu0 0.0
        %1137 = vmatpush2.msra.mxu0 0.0
        %1138 = vmatprep.subr.mxu0 0.0
        %1139 = vmatpush2.msra.mxu0 0.0
        %1140 = vmatprep.subr.mxu0 0.0
        %1141 = vmatpush2.msra.mxu0 0.0
        %1142 = vmatprep.subr.mxu0 0.0
        %1143 = vmatpush2.msra.mxu0 0.0
        %1144 = vmatprep.subr.mxu0 0.0
        %1145 = vmatpush2.msra.mxu0 0.0
        %1146 = vmatprep.subr.mxu0 0.0
        %1147 = vmatpush2.msra.mxu0 0.0
        %1148 = vmatprep.subr.mxu0 0.0
        %1149 = vmatpush2.msra.mxu0 0.0
        %1150 = vmatprep.mubr.f32.mxu0 0.0
        %1151 = vmatmul.mubr.f32.gmra.mxu0 %v1081
        %v1152 = vpop.f32.mrf.mxu0
        %v1153 = vadd.f32 0.0, %v1152
        %v1154 = vpop.f32.mrf.mxu0
        %1155 = vmatprep.mubr.f32.mxu0 0.0
        %1156 = vmatmul.mubr.f32.gmra.mxu0 %v1084
        %v1157 = vpop.f32.mrf.mxu0
        %v1158 = vadd.f32 0.0, %v1157
        %v1159 = vpop.f32.mrf.mxu0
        %1160 = vdwg.mxu0
        %v1161 = vmul.f32 %v1153, %v1078
        %v1162 = vmul.f32 %v1158, %v1079
        %v1163 = vld [vmem:[%s10] sm:$0xff]
        %v1164 = vld [vmem:[%s10 + $0x8] sm:$0xff]
        %v1165 = vld [vmem:[%s10 + $0x10] sm:$0xff]
        %v1166 = vld [vmem:[%s10 + $0x18] sm:$0xff]
        %v1167 = vld [vmem:[%s11] sm:$0x1]
        %v1169 = vlaneseq
        %v1170 = vshrl.u32 %v1169, 7
        %v1171 = vsub.s32 0, %v1170
        %v1172 = vrot.slane %v1167, %v1171
        %v1175 = vsel %vm984, %v1161, 0
        %v1178 = vsel %vm984, %v1162, 0
        %1180 = vmatprep.subr.mxu0 0.0
        %1181 = vmatpush1.msra.mxu0 0.0
        %1182 = vmatprep.subr.mxu0 0.0
        %1183 = vmatpush1.msra.mxu0 0.0
        %1184 = vmatprep.subr.mxu0 0.0
        %1185 = vmatpush1.msra.mxu0 0.0
        %1186 = vmatprep.subr.mxu0 0.0
        %1187 = vmatpush1.msra.mxu0 0.0
        %1188 = vmatprep.subr.mxu0 0.0
        %1189 = vmatpush1.msra.mxu0 0.0
        %1190 = vmatprep.subr.mxu0 0.0
        %1191 = vmatpush1.msra.mxu0 0.0
        %1192 = vmatprep.subr.mxu0 0.0
        %1193 = vmatpush1.msra.mxu0 0.0
        %1194 = vmatprep.subr.mxu0 0.0
        %1195 = vmatpush1.msra.mxu0 0.0
        %1196 = vmatprep.subr.mxu0 0.0
        %1197 = vmatpush1.msra.mxu0 0.0
        %1198 = vmatprep.subr.mxu0 0.0
        %1199 = vmatpush1.msra.mxu0 0.0
        %1200 = vmatprep.subr.mxu0 0.0
        %1201 = vmatpush1.msra.mxu0 0.0
        %1202 = vmatprep.subr.mxu0 0.0
        %1203 = vmatpush1.msra.mxu0 0.0
        %1204 = vmatprep.subr.mxu0 0.0
        %1205 = vmatpush1.msra.mxu0 %v1166
        %1206 = vmatprep.subr.mxu0 0.0
        %1207 = vmatpush1.msra.mxu0 %v1165
        %1208 = vmatprep.subr.mxu0 0.0
        %1209 = vmatpush1.msra.mxu0 %v1164
        %1210 = vmatprep.subr.mxu0 0.0
        %1211 = vmatpush1.msra.mxu0 %v1163
        %1212 = vmatprep.subr.mxu0 0.0
        %1213 = vmatpush2.msra.mxu0 0.0
        %1214 = vmatprep.subr.mxu0 0.0
        %1215 = vmatpush2.msra.mxu0 0.0
        %1216 = vmatprep.subr.mxu0 0.0
        %1217 = vmatpush2.msra.mxu0 0.0
        %1218 = vmatprep.subr.mxu0 0.0
        %1219 = vmatpush2.msra.mxu0 0.0
        %1220 = vmatprep.subr.mxu0 0.0
        %1221 = vmatpush2.msra.mxu0 0.0
        %1222 = vmatprep.subr.mxu0 0.0
        %1223 = vmatpush2.msra.mxu0 0.0
        %1224 = vmatprep.subr.mxu0 0.0
        %1225 = vmatpush2.msra.mxu0 0.0
        %1226 = vmatprep.subr.mxu0 0.0
        %1227 = vmatpush2.msra.mxu0 0.0
        %1228 = vmatprep.subr.mxu0 0.0
        %1229 = vmatpush2.msra.mxu0 0.0
        %1230 = vmatprep.subr.mxu0 0.0
        %1231 = vmatpush2.msra.mxu0 0.0
        %1232 = vmatprep.subr.mxu0 0.0
        %1233 = vmatpush2.msra.mxu0 0.0
        %1234 = vmatprep.subr.mxu0 0.0
        %1235 = vmatpush2.msra.mxu0 0.0
        %1236 = vmatprep.subr.mxu0 0.0
        %1237 = vmatpush2.msra.mxu0 0.0
        %1238 = vmatprep.subr.mxu0 0.0
        %1239 = vmatpush2.msra.mxu0 0.0
        %1240 = vmatprep.subr.mxu0 0.0
        %1241 = vmatpush2.msra.mxu0 0.0
        %1242 = vmatprep.subr.mxu0 0.0
        %1243 = vmatpush2.msra.mxu0 0.0
        %1244 = vmatprep.mubr.f32.mxu0 0.0
        %1245 = vmatmul.mubr.f32.gmra.mxu0 %v1175
        %v1246 = vpop.f32.mrf.mxu0
        %v1247 = vadd.f32 %v1172, %v1246
        %v1248 = vpop.f32.mrf.mxu0
        %1249 = vmatprep.mubr.f32.mxu0 0.0
        %1250 = vmatmul.mubr.f32.gmra.mxu0 %v1178
        %v1251 = vpop.f32.mrf.mxu0
        %v1252 = vadd.f32 %v1172, %v1251
        %v1253 = vpop.f32.mrf.mxu0
        %1254 = vdwg.mxu0
        %1256 = vset.pattern.permute.xlu0 0
        %1257 = vperm.xlu0 %1256, %v552
        %v1258 = vpop.permute.xlu0 %1257
        %1261 = vset.pattern.permute.xlu0 0
        %1262 = vperm.xlu0 %1261, %v553
        %v1263 = vpop.permute.xlu0 %1262
        %v1265 = vmul.f32 %v1247, %v1258
        %v1266 = vmul.f32 %v1252, %v1263
        %1267 = vst [vmem:[%s514] sm:$0xff] %v1265
        %1268 = vst [vmem:[%s514 + $0x8] sm:$0xff] %v1266
        %s1269 = sand.u32 %s346, 1
        %s1270 = scalar_lea.sflag [#allocation3], %s1269
        %s1271 = sand.u32 %s346, 1
        %s1272 = smul.addr %s1271, 16
        %s1273 = scalar_lea.vmem [#allocation2], %s1272
        // Predicated region
        $region73: #{tpu_custom_call.1} parent=71 // pred_check
          %p1274 = pneg %p356
        $region74: #{tpu_custom_call.1} parent=71 // pred_check_branch
          %1276 = sbr.rel (%p1274) target = $region76
        $region75: #{tpu_custom_call.1} parent=71 // pred_region
          %s1277 = smul.u32 2, %s32
          %s1279 = ssub.s32 256, 256
          %1280 = vsyncadd %s1270, %s1279
          %s1281 = smul.addr %s31, 2
          %s1282 = sadd.s32 %s1277, %s1281
          %s1283 = smul.addr %s1282, 128
          %s1284 = scalar_lea.hbm %s13, %s1283
          %s1285 = sshll.u32 %s1273, 4
          %s1286 = int_to_ptr.vmem [resolvable:$true] %s1285
          %1291 = dma.vmem_to_hbm [thread:$0]  %s1286, 256, %s1284, %s1270, 128, 128, 8
        $region76: #{tpu_custom_call.1} parent=71 // pred_fallthru
          _
      $region72: #{tpu_custom_call.1} parent=5 // pred_fallthru
        _
      %p1292 = scmp.le.s32.totalorder 2, %s22
      // Predicated region
      $region77: #{tpu_custom_call.1} parent=5 // pred_check
        %p1293 = pneg %p1292
      $region78: #{tpu_custom_call.1} parent=5 // pred_check_branch
        %1295 = sbr.rel (%p1293) target = $region80
      $region79: #{tpu_custom_call.1} parent=5 // pred_region
        %s1296 = ssub.s32 %s22, 2
        // Predicated region
        $region81: #{tpu_custom_call.1} parent=79 // pred_check
          %p1297 = pneg %p362
        $region82: #{tpu_custom_call.1} parent=79 // pred_check_branch
          %1299 = sbr.rel (%p1297) target = $region84
        $region83: #{tpu_custom_call.1} parent=79 // pred_region
          %s1300 = sand.u32 %s347, 1
          %s1301 = scalar_lea.sflag [#allocation3], %s1300
          %s1302 = sand.u32 %s347, 1
          %s1303 = smul.addr %s1302, 16
          %s1304 = scalar_lea.vmem [#allocation2], %s1303
          %1305 = dma.done %s1301, 256
        $region84: #{tpu_custom_call.1} parent=79 // pred_fallthru
          _
      $region80: #{tpu_custom_call.1} parent=5 // pred_fallthru
        _
    $region6: #{tpu_custom_call.1} parent=1 // loop_footer
      %s26 = sadd.s32 1, %s22
    $region7: #{tpu_custom_call.1} parent=1 // loop_footer_branch
      %21 = sbr.rel target = $region3
    $region8: #{tpu_custom_call.1} parent=1 // loop_exit
      _
    %1306 = vsyncpa [#allocation3], 1
    %s1307 = scalar_lea.sflag [#allocation3], 1
    %1308 = vsyncpa %s1307, 1

</llo_original>
